<compile_context>
chip_gen: v7x
topology: tpu7x:2x2x1
jax: 0.10.0
libtpu: 0.0.40
codegen_flags: <defaults>
</compile_context>

<pallas_src>
import functools

import jax
import jax.numpy as jnp
from jax.experimental import pallas as pl
from jax.experimental.pallas import tpu as pltpu

LANE = 128  # lane width: pad channels to a multiple of this


def _round_up(x, m):
    return (x + m - 1) // m * m


# --------------------------------------------------------------------------- #
# Fused kernel: all TemporalBlocks, one batch tile per grid step
# --------------------------------------------------------------------------- #
def _tcn_fused_kernel(*refs, B, L, Cpad, K, dilations, has_ds):
    """Ref layout (inputs..., outputs..., scratch...):

       x_ref  : (B, L, Cpad)        bf16  input batch tile
       w1_ref : (nl, K*Cpad, Cpad)  bf16  folded (tap-major) conv1 weights
       b1_ref : (nl, 1, Cpad)       f32
       w2_ref : (nl, K*Cpad, Cpad)  bf16  folded conv2 weights
       b2_ref : (nl, 1, Cpad)       f32
       wd_ref : (n_ds, Cpad, Cpad)  bf16  1x1 downsample weights (ds layers only)
       bd_ref : (n_ds, 1, Cpad)     f32
       out_ref: (B, L, Cpad)        bf16
       cat_ref: (B*L, K*Cpad)       bf16  VMEM scratch, pre-concatenated taps
    """
    n_ds = sum(has_ds)
    if n_ds > 0:
        (x_ref, w1_ref, b1_ref, w2_ref, b2_ref, wd_ref, bd_ref,
         out_ref, cat_ref) = refs
    else:
        (x_ref, w1_ref, b1_ref, w2_ref, b2_ref,
         out_ref, cat_ref) = refs
        wd_ref = bd_ref = None

    def fill_cat(a_blc, d):
        """Store tap k's row-shifted copy of a_blc (B, L, Cpad) into column
        block k of cat_ref; zero only the causal head rows of each block.
        All indices here are static Python ints."""
        for k in range(K):
            col = pl.ds(k * Cpad, Cpad)
            z = (K - 1 - k) * d                 # causal zero rows for this tap
            for b in range(B):
                r0 = b * L
                if z >= L:
                    cat_ref[pl.ds(r0, L), col] = jnp.zeros(
                        (L, Cpad), cat_ref.dtype)
                    continue
                if z > 0:
                    cat_ref[pl.ds(r0, z), col] = jnp.zeros(
                        (z, Cpad), cat_ref.dtype)
                cat_ref[pl.ds(r0 + z, L - z), col] = (
                    a_blc[b, :L - z, :].astype(cat_ref.dtype))

    # Residual / activation stream: resident in VMEM for the whole net (f32).
    h = x_ref[...].astype(jnp.float32)                      # (B, L, Cpad)

    ds_idx = 0
    for li, d in enumerate(dilations):
        # ---- conv1 (causal dilated; K taps folded into ONE matmul) + ReLU ---
        fill_cat(h, d)
        a1 = jnp.dot(cat_ref[...], w1_ref[li],
                     preferred_element_type=jnp.float32)
        h1 = jnp.maximum(a1 + b1_ref[li], 0.0)              # (B*L, Cpad) f32
        # dropout1: identity (inference)

        # ---- conv2 + ReLU ----------------------------------------------------
        fill_cat(h1.reshape(B, L, Cpad), d)
        a2 = jnp.dot(cat_ref[...], w2_ref[li],
                     preferred_element_type=jnp.float32)
        h2 = jnp.maximum(a2 + b2_ref[li], 0.0)
        # dropout2: identity (inference)

        # ---- residual + final ReLU -------------------------------------------
        h_flat = h.reshape(B * L, Cpad)
        if has_ds[li]:
            res = jnp.dot(h_flat.astype(jnp.bfloat16), wd_ref[ds_idx],
                          preferred_element_type=jnp.float32) + bd_ref[ds_idx]
            ds_idx += 1
        else:
            res = h_flat                                     # identity, f32
        h = jnp.maximum(h2 + res, 0.0).reshape(B, L, Cpad)

    out_ref[...] = h.astype(out_ref.dtype)


# --------------------------------------------------------------------------- #
# Wrapper: one pallas_call for the whole network
# --------------------------------------------------------------------------- #
def temporal_conv_net(x_ncl, bundle):
    """x_ncl: (N, C, L) like PyTorch. Returns (N, C_last, L)."""
    N, C, L = x_ncl.shape
    Cpad = bundle["Cpad"]
    K = bundle["K"]
    dilations = bundle["dilations"]
    has_ds = bundle["has_ds"]
    nl = len(dilations)
    n_ds = sum(has_ds)

    # Batch tile: aim for B_tile * L >= 128 MXU rows per grid step.
    B_tile = max(1, min(N, pl.cdiv(128, L)))
    N_pad = _round_up(N, B_tile)

    # Channels-last + lane/batch padding (single relayout at the boundary).
    h = jnp.transpose(x_ncl, (0, 2, 1))                      # (N, L, C)
    h = jnp.pad(h, ((0, N_pad - N), (0, 0), (0, Cpad - C))).astype(jnp.bfloat16)

    in_specs = [
        pl.BlockSpec((B_tile, L, Cpad), lambda n: (n, 0, 0)),       # x
        pl.BlockSpec((nl, K * Cpad, Cpad), lambda n: (0, 0, 0)),    # w1 (all layers)
        pl.BlockSpec((nl, 1, Cpad), lambda n: (0, 0, 0)),           # b1
        pl.BlockSpec((nl, K * Cpad, Cpad), lambda n: (0, 0, 0)),    # w2
        pl.BlockSpec((nl, 1, Cpad), lambda n: (0, 0, 0)),           # b2
    ]
    args = [h, bundle["w1"], bundle["b1"], bundle["w2"], bundle["b2"]]
    if n_ds > 0:
        in_specs += [
            pl.BlockSpec((n_ds, Cpad, Cpad), lambda n: (0, 0, 0)),  # wd
            pl.BlockSpec((n_ds, 1, Cpad), lambda n: (0, 0, 0)),     # bd
        ]
        args += [bundle["wd"], bundle["bd"]]

    kern = functools.partial(
        _tcn_fused_kernel, B=B_tile, L=L, Cpad=Cpad, K=K,
        dilations=tuple(dilations), has_ds=tuple(has_ds))

    out = pl.pallas_call(
        kern,
        out_shape=jax.ShapeDtypeStruct((N_pad, L, Cpad), jnp.bfloat16),
        grid=(N_pad // B_tile,),
        in_specs=in_specs,
        out_specs=pl.BlockSpec((B_tile, L, Cpad), lambda n: (n, 0, 0)),
        scratch_shapes=[
            pltpu.VMEM((B_tile * L, K * Cpad), jnp.bfloat16),  # tap cat-scratch
        ],
        compiler_params=pltpu.CompilerParams(
            dimension_semantics=("parallel",)),
    )(*args)

    # TODO(synk): keep the model channels-last end-to-end in a real pipeline
    # and drop this final relayout; kept here for PyTorch NCL output parity.
    out = out[:N, :, :bundle["c_last"]].astype(x_ncl.dtype)
    return jnp.transpose(out, (0, 2, 1))                     # back to (N, C, L)


# --------------------------------------------------------------------------- #
# Parameter preparation (plain-JAX glue: weight_norm, fold taps, lane padding)
# --------------------------------------------------------------------------- #
def _weight_norm_effective(v, g):
    """PyTorch weight_norm: W = g * v / ||v||, norm over (Cin, K) per out chan.
    v: (Cout, Cin, K) torch layout, g: (Cout,). Returns (K, Cin, Cout)."""
    norm = jnp.sqrt(jnp.sum(v * v, axis=(1, 2), keepdims=True))   # (Cout,1,1)
    w = v * (g[:, None, None] / norm)                             # (Cout,Cin,K)
    return jnp.transpose(w, (2, 1, 0))                            # (K,Cin,Cout)


def _pad_and_fold(w_kio, cin_pad, cout_pad):
    """(K, Cin, Cout) -> lane-padded, tap-folded (K*Cin_pad, Cout_pad) bf16."""
    K, cin, cout = w_kio.shape
    w = jnp.zeros((K, cin_pad, cout_pad), jnp.float32)
    w = w.at[:, :cin, :cout].set(w_kio)
    return w.reshape(K * cin_pad, cout_pad).astype(jnp.bfloat16)


def _pad_bias(b, cpad):
    out = jnp.zeros((1, cpad), jnp.float32)
    return out.at[:, :b.shape[1]].set(b)


def init_tcn_params(key, num_inputs, num_channels, kernel_size):
    """Deterministic synthetic parameters mirroring TemporalConvNet.__init__.
    Returns a bundle with layer-stacked, lane-padded, tap-folded weights."""
    Cpad = _round_up(max([num_inputs] + list(num_channels)), LANE)
    w1s, b1s, w2s, b2s, wds, bds = [], [], [], [], [], []
    dilations, has_ds = [], []

    for i, c_out in enumerate(num_channels):
        c_in = num_inputs if i == 0 else num_channels[i - 1]
        d = 2 ** i
        keys = jax.random.split(key, 8)
        key = keys[0]

        v1 = 0.01 * jax.random.normal(keys[1], (c_out, c_in, kernel_size), jnp.float32)
        g1 = jnp.sqrt(jnp.sum(v1 * v1, axis=(1, 2)))     # weight_norm default init
        b1 = 0.01 * jax.random.normal(keys[2], (1, c_out), jnp.float32)

        v2 = 0.01 * jax.random.normal(keys[3], (c_out, c_out, kernel_size), jnp.float32)
        g2 = jnp.sqrt(jnp.sum(v2 * v2, axis=(1, 2)))
        b2 = 0.01 * jax.random.normal(keys[4], (1, c_out), jnp.float32)

        w1s.append(_pad_and_fold(_weight_norm_effective(v1, g1), Cpad, Cpad))
        b1s.append(_pad_bias(b1, Cpad))
        w2s.append(_pad_and_fold(_weight_norm_effective(v2, g2), Cpad, Cpad))
        b2s.append(_pad_bias(b2, Cpad))

        if c_in != c_out:
            wd_raw = 0.01 * jax.random.normal(keys[5], (c_in, c_out), jnp.float32)
            bd_raw = 0.01 * jax.random.normal(keys[6], (1, c_out), jnp.float32)
            wd = jnp.zeros((Cpad, Cpad), jnp.float32).at[:c_in, :c_out].set(wd_raw)
            wds.append(wd.astype(jnp.bfloat16))
            bds.append(_pad_bias(bd_raw, Cpad))
            has_ds.append(True)
        else:
            has_ds.append(False)
        dilations.append(d)

    return dict(
        w1=jnp.stack(w1s), b1=jnp.stack(b1s),
        w2=jnp.stack(w2s), b2=jnp.stack(b2s),
        wd=jnp.stack(wds) if wds else None,
        bd=jnp.stack(bds) if bds else None,
        dilations=tuple(dilations), has_ds=tuple(has_ds),
        K=kernel_size, Cpad=Cpad, c_last=num_channels[-1],
    )


# --------------------------------------------------------------------------- #
# Pure-JAX reference mirroring the kernel math exactly (bf16 matmul inputs,
# f32 accumulation, f32 residual stream).
# --------------------------------------------------------------------------- #
def _reference(x_ncl, bundle):
    N, C, L = x_ncl.shape
    Cpad, K = bundle["Cpad"], bundle["K"]
    h = jnp.transpose(x_ncl, (0, 2, 1))
    h = jnp.pad(h, ((0, 0), (0, 0), (0, Cpad - C)))
    h = h.astype(jnp.bfloat16).astype(jnp.float32)

    ds_i = 0
    for li, d in enumerate(bundle["dilations"]):
        p = (K - 1) * d

        def taps(a):
            ap = jnp.pad(a, ((0, 0), (p, 0), (0, 0)))
            return jnp.concatenate(
                [ap[:, k * d:k * d + L, :] for k in range(K)],
                axis=-1).astype(jnp.bfloat16)

        a1 = jnp.einsum('nlc,co->nlo', taps(h), bundle["w1"][li],
                        preferred_element_type=jnp.float32)
        h1 = jnp.maximum(a1 + bundle["b1"][li], 0.0)
        a2 = jnp.einsum('nlc,co->nlo', taps(h1), bundle["w2"][li],
                        preferred_element_type=jnp.float32)
        h2 = jnp.maximum(a2 + bundle["b2"][li], 0.0)
        if bundle["has_ds"][li]:
            res = jnp.einsum('nlc,co->nlo', h.astype(jnp.bfloat16),
                             bundle["wd"][ds_i],
                             preferred_element_type=jnp.float32) + bundle["bd"][ds_i]
            ds_i += 1
        else:
            res = h
        h = jnp.maximum(h2 + res, 0.0)

    out = h.astype(jnp.bfloat16)[:, :, :bundle["c_last"]].astype(x_ncl.dtype)
    return jnp.transpose(out, (0, 2, 1))


if __name__ == "__main__":
    N, C_IN, L = 2, 4, 16
    NUM_CHANNELS = [8, 8]      # two TemporalBlocks: dilations 1 and 2
    KERNEL_SIZE = 2

    key = jax.random.PRNGKey(0)
    kx, kp = jax.random.split(key)
    x = jax.random.normal(kx, (N, C_IN, L), jnp.float32)     # NCL, like PyTorch

    bundle = init_tcn_params(kp, C_IN, NUM_CHANNELS, KERNEL_SIZE)

    out = jax.block_until_ready(temporal_conv_net(x, bundle))
    assert out.shape == (N, NUM_CHANNELS[-1], L), out.shape
    assert bool(jnp.all(jnp.isfinite(out)))

    ref = jax.block_until_ready(_reference(x, bundle))
    assert jnp.allclose(out, ref, atol=1e-3, rtol=1e-2), \
        float(jnp.max(jnp.abs(out - ref)))

    print("KERNEL_OK")
</pallas_src>

<mosaic_0001>
module attributes {stable_mosaic.version = 11 : i64} {
  func.func @_tcn_fused_kernel(%arg0: i32, %arg1: memref<2x16x128xbf16, #tpu.memory_space<vmem>>, %arg2: memref<2x256x128xbf16, #tpu.memory_space<vmem>>, %arg3: memref<2x1x128xf32, #tpu.memory_space<vmem>>, %arg4: memref<2x256x128xbf16, #tpu.memory_space<vmem>>, %arg5: memref<2x1x128xf32, #tpu.memory_space<vmem>>, %arg6: memref<1x128x128xbf16, #tpu.memory_space<vmem>>, %arg7: memref<1x1x128xf32, #tpu.memory_space<vmem>>, %arg8: memref<2x16x128xbf16, #tpu.memory_space<vmem>>, %arg9: memref<32x256xbf16, #tpu.memory_space<vmem>>) attributes {dimension_semantics = [#tpu.dimension_semantics<parallel>], iteration_bounds = array<i64: 1>, scalar_prefetch = 0 : i64, scratch_operands = 1 : i64, tpu.core_type = #tpu.core_type<tc>, window_params = [{transform_indices = @transform_0, window_bounds = array<i64: 2, 16, 128>}, {pipeline_mode = #tpu.pipeline_mode<synchronous>, transform_indices = @transform_1, window_bounds = array<i64: 2, 256, 128>}, {pipeline_mode = #tpu.pipeline_mode<synchronous>, transform_indices = @transform_2, window_bounds = array<i64: 2, 1, 128>}, {pipeline_mode = #tpu.pipeline_mode<synchronous>, transform_indices = @transform_3, window_bounds = array<i64: 2, 256, 128>}, {pipeline_mode = #tpu.pipeline_mode<synchronous>, transform_indices = @transform_4, window_bounds = array<i64: 2, 1, 128>}, {pipeline_mode = #tpu.pipeline_mode<synchronous>, transform_indices = @transform_5, window_bounds = array<i64: 1, 128, 128>}, {pipeline_mode = #tpu.pipeline_mode<synchronous>, transform_indices = @transform_6, window_bounds = array<i64: 1, 1, 128>}, {transform_indices = @transform_7, window_bounds = array<i64: 2, 16, 128>}]} {
    %c0 = arith.constant 0 : index
    %c0_0 = arith.constant 0 : index
    %c0_1 = arith.constant 0 : index
    %0 = vector.load %arg1[%c0, %c0_0, %c0_1] : memref<2x16x128xbf16, #tpu.memory_space<vmem>>, vector<2x16x128xbf16>
    %1 = arith.extf %0 : vector<2x16x128xbf16> to vector<2x16x128xf32>
    %cst = arith.constant 0.000000e+00 : bf16
    %2 = vector.broadcast %cst : bf16 to vector<1x128xbf16>
    %c0_2 = arith.constant 0 : index
    %c0_3 = arith.constant 0 : index
    %3 = vector.load %arg9[%c0_2, %c0_3] : memref<32x256xbf16, #tpu.memory_space<vmem>>, vector<1x128xbf16>
    tpu.vector_store %arg9[%c0_2, %c0_3], %2 {strides = array<i32>} : memref<32x256xbf16, #tpu.memory_space<vmem>>, vector<1x128xbf16>,
    %4 = vector.extract_strided_slice %1 {offsets = [0, 0, 0], sizes = [1, 15, 128], strides = [1, 1, 1]} : vector<2x16x128xf32> to vector<1x15x128xf32>
    %5 = vector.shape_cast %4 : vector<1x15x128xf32> to vector<15x128xf32>
    %6 = arith.truncf %5 : vector<15x128xf32> to vector<15x128xbf16>
    %c1 = arith.constant 1 : index
    %c0_4 = arith.constant 0 : index
    %7 = vector.load %arg9[%c1, %c0_4] : memref<32x256xbf16, #tpu.memory_space<vmem>>, vector<15x128xbf16>
    tpu.vector_store %arg9[%c1, %c0_4], %6 {strides = array<i32>} : memref<32x256xbf16, #tpu.memory_space<vmem>>, vector<15x128xbf16>,
    %cst_5 = arith.constant 0.000000e+00 : bf16
    %8 = vector.broadcast %cst_5 : bf16 to vector<1x128xbf16>
    %c16 = arith.constant 16 : index
    %c0_6 = arith.constant 0 : index
    %9 = vector.load %arg9[%c16, %c0_6] : memref<32x256xbf16, #tpu.memory_space<vmem>>, vector<1x128xbf16>
    tpu.vector_store %arg9[%c16, %c0_6], %8 {strides = array<i32>} : memref<32x256xbf16, #tpu.memory_space<vmem>>, vector<1x128xbf16>,
    %10 = vector.extract_strided_slice %1 {offsets = [1, 0, 0], sizes = [1, 15, 128], strides = [1, 1, 1]} : vector<2x16x128xf32> to vector<1x15x128xf32>
    %11 = vector.shape_cast %10 : vector<1x15x128xf32> to vector<15x128xf32>
    %12 = arith.truncf %11 : vector<15x128xf32> to vector<15x128xbf16>
    %c17 = arith.constant 17 : index
    %c0_7 = arith.constant 0 : index
    %13 = vector.load %arg9[%c17, %c0_7] : memref<32x256xbf16, #tpu.memory_space<vmem>>, vector<15x128xbf16>
    tpu.vector_store %arg9[%c17, %c0_7], %12 {strides = array<i32>} : memref<32x256xbf16, #tpu.memory_space<vmem>>, vector<15x128xbf16>,
    %14 = vector.extract_strided_slice %1 {offsets = [0, 0, 0], sizes = [1, 16, 128], strides = [1, 1, 1]} : vector<2x16x128xf32> to vector<1x16x128xf32>
    %15 = vector.shape_cast %14 : vector<1x16x128xf32> to vector<16x128xf32>
    %16 = arith.truncf %15 : vector<16x128xf32> to vector<16x128xbf16>
    %c0_8 = arith.constant 0 : index
    %c128 = arith.constant 128 : index
    %17 = vector.load %arg9[%c0_8, %c128] : memref<32x256xbf16, #tpu.memory_space<vmem>>, vector<16x128xbf16>
    tpu.vector_store %arg9[%c0_8, %c128], %16 {strides = array<i32>} : memref<32x256xbf16, #tpu.memory_space<vmem>>, vector<16x128xbf16>,
    %18 = vector.extract_strided_slice %1 {offsets = [1, 0, 0], sizes = [1, 16, 128], strides = [1, 1, 1]} : vector<2x16x128xf32> to vector<1x16x128xf32>
    %19 = vector.shape_cast %18 : vector<1x16x128xf32> to vector<16x128xf32>
    %20 = arith.truncf %19 : vector<16x128xf32> to vector<16x128xbf16>
    %c16_9 = arith.constant 16 : index
    %c128_10 = arith.constant 128 : index
    %21 = vector.load %arg9[%c16_9, %c128_10] : memref<32x256xbf16, #tpu.memory_space<vmem>>, vector<16x128xbf16>
    tpu.vector_store %arg9[%c16_9, %c128_10], %20 {strides = array<i32>} : memref<32x256xbf16, #tpu.memory_space<vmem>>, vector<16x128xbf16>,
    %c0_11 = arith.constant 0 : index
    %c0_12 = arith.constant 0 : index
    %22 = vector.load %arg9[%c0_11, %c0_12] : memref<32x256xbf16, #tpu.memory_space<vmem>>, vector<32x256xbf16>
    %c0_13 = arith.constant 0 : index
    %c0_14 = arith.constant 0 : index
    %c0_15 = arith.constant 0 : index
    %23 = vector.load %arg2[%c0_13, %c0_14, %c0_15] : memref<2x256x128xbf16, #tpu.memory_space<vmem>>, vector<1x256x128xbf16>
    %24 = vector.shape_cast %23 : vector<1x256x128xbf16> to vector<256x128xbf16>
    %cst_16 = arith.constant dense<0.000000e+00> : vector<32x128xf32>
    %25 = tpu.matmul %22, %24, %cst_16 {dimension_numbers = #tpu.dot_dimension_numbers<[1], [0], [0], [1], [0, 0, 1, 1], [], []>} : vector<32x256xbf16>, vector<256x128xbf16>, vector<32x128xf32> -> vector<32x128xf32>
    %c0_17 = arith.constant 0 : index
    %c0_18 = arith.constant 0 : index
    %c0_19 = arith.constant 0 : index
    %26 = vector.load %arg3[%c0_17, %c0_18, %c0_19] : memref<2x1x128xf32, #tpu.memory_space<vmem>>, vector<1x1x128xf32>
    %27 = vector.shape_cast %26 : vector<1x1x128xf32> to vector<1x128xf32>
    %28 = vector.broadcast %27 : vector<1x128xf32> to vector<32x128xf32>
    %29 = arith.addf %25, %28 : vector<32x128xf32>
    %cst_20 = arith.constant 0.000000e+00 : f32
    %30 = vector.broadcast %cst_20 : f32 to vector<32x128xf32>
    %31 = arith.maximumf %29, %30 : vector<32x128xf32>
    %32 = vector.shape_cast %31 : vector<32x128xf32> to vector<2x16x128xf32>
    %cst_21 = arith.constant 0.000000e+00 : bf16
    %33 = vector.broadcast %cst_21 : bf16 to vector<1x128xbf16>
    %c0_22 = arith.constant 0 : index
    %c0_23 = arith.constant 0 : index
    %34 = vector.load %arg9[%c0_22, %c0_23] : memref<32x256xbf16, #tpu.memory_space<vmem>>, vector<1x128xbf16>
    tpu.vector_store %arg9[%c0_22, %c0_23], %33 {strides = array<i32>} : memref<32x256xbf16, #tpu.memory_space<vmem>>, vector<1x128xbf16>,
    %35 = vector.extract_strided_slice %32 {offsets = [0, 0, 0], sizes = [1, 15, 128], strides = [1, 1, 1]} : vector<2x16x128xf32> to vector<1x15x128xf32>
    %36 = vector.shape_cast %35 : vector<1x15x128xf32> to vector<15x128xf32>
    %37 = arith.truncf %36 : vector<15x128xf32> to vector<15x128xbf16>
    %c1_24 = arith.constant 1 : index
    %c0_25 = arith.constant 0 : index
    %38 = vector.load %arg9[%c1_24, %c0_25] : memref<32x256xbf16, #tpu.memory_space<vmem>>, vector<15x128xbf16>
    tpu.vector_store %arg9[%c1_24, %c0_25], %37 {strides = array<i32>} : memref<32x256xbf16, #tpu.memory_space<vmem>>, vector<15x128xbf16>,
    %cst_26 = arith.constant 0.000000e+00 : bf16
    %39 = vector.broadcast %cst_26 : bf16 to vector<1x128xbf16>
    %c16_27 = arith.constant 16 : index
    %c0_28 = arith.constant 0 : index
    %40 = vector.load %arg9[%c16_27, %c0_28] : memref<32x256xbf16, #tpu.memory_space<vmem>>, vector<1x128xbf16>
    tpu.vector_store %arg9[%c16_27, %c0_28], %39 {strides = array<i32>} : memref<32x256xbf16, #tpu.memory_space<vmem>>, vector<1x128xbf16>,
    %41 = vector.extract_strided_slice %32 {offsets = [1, 0, 0], sizes = [1, 15, 128], strides = [1, 1, 1]} : vector<2x16x128xf32> to vector<1x15x128xf32>
    %42 = vector.shape_cast %41 : vector<1x15x128xf32> to vector<15x128xf32>
    %43 = arith.truncf %42 : vector<15x128xf32> to vector<15x128xbf16>
    %c17_29 = arith.constant 17 : index
    %c0_30 = arith.constant 0 : index
    %44 = vector.load %arg9[%c17_29, %c0_30] : memref<32x256xbf16, #tpu.memory_space<vmem>>, vector<15x128xbf16>
    tpu.vector_store %arg9[%c17_29, %c0_30], %43 {strides = array<i32>} : memref<32x256xbf16, #tpu.memory_space<vmem>>, vector<15x128xbf16>,
    %45 = vector.extract_strided_slice %32 {offsets = [0, 0, 0], sizes = [1, 16, 128], strides = [1, 1, 1]} : vector<2x16x128xf32> to vector<1x16x128xf32>
    %46 = vector.shape_cast %45 : vector<1x16x128xf32> to vector<16x128xf32>
    %47 = arith.truncf %46 : vector<16x128xf32> to vector<16x128xbf16>
    %c0_31 = arith.constant 0 : index
    %c128_32 = arith.constant 128 : index
    %48 = vector.load %arg9[%c0_31, %c128_32] : memref<32x256xbf16, #tpu.memory_space<vmem>>, vector<16x128xbf16>
    tpu.vector_store %arg9[%c0_31, %c128_32], %47 {strides = array<i32>} : memref<32x256xbf16, #tpu.memory_space<vmem>>, vector<16x128xbf16>,
    %49 = vector.extract_strided_slice %32 {offsets = [1, 0, 0], sizes = [1, 16, 128], strides = [1, 1, 1]} : vector<2x16x128xf32> to vector<1x16x128xf32>
    %50 = vector.shape_cast %49 : vector<1x16x128xf32> to vector<16x128xf32>
    %51 = arith.truncf %50 : vector<16x128xf32> to vector<16x128xbf16>
    %c16_33 = arith.constant 16 : index
    %c128_34 = arith.constant 128 : index
    %52 = vector.load %arg9[%c16_33, %c128_34] : memref<32x256xbf16, #tpu.memory_space<vmem>>, vector<16x128xbf16>
    tpu.vector_store %arg9[%c16_33, %c128_34], %51 {strides = array<i32>} : memref<32x256xbf16, #tpu.memory_space<vmem>>, vector<16x128xbf16>,
    %c0_35 = arith.constant 0 : index
    %c0_36 = arith.constant 0 : index
    %53 = vector.load %arg9[%c0_35, %c0_36] : memref<32x256xbf16, #tpu.memory_space<vmem>>, vector<32x256xbf16>
    %c0_37 = arith.constant 0 : index
    %c0_38 = arith.constant 0 : index
    %c0_39 = arith.constant 0 : index
    %54 = vector.load %arg4[%c0_37, %c0_38, %c0_39] : memref<2x256x128xbf16, #tpu.memory_space<vmem>>, vector<1x256x128xbf16>
    %55 = vector.shape_cast %54 : vector<1x256x128xbf16> to vector<256x128xbf16>
    %cst_40 = arith.constant dense<0.000000e+00> : vector<32x128xf32>
    %56 = tpu.matmul %53, %55, %cst_40 {dimension_numbers = #tpu.dot_dimension_numbers<[1], [0], [0], [1], [0, 0, 1, 1], [], []>} : vector<32x256xbf16>, vector<256x128xbf16>, vector<32x128xf32> -> vector<32x128xf32>
    %c0_41 = arith.constant 0 : index
    %c0_42 = arith.constant 0 : index
    %c0_43 = arith.constant 0 : index
    %57 = vector.load %arg5[%c0_41, %c0_42, %c0_43] : memref<2x1x128xf32, #tpu.memory_space<vmem>>, vector<1x1x128xf32>
    %58 = vector.shape_cast %57 : vector<1x1x128xf32> to vector<1x128xf32>
    %59 = vector.broadcast %58 : vector<1x128xf32> to vector<32x128xf32>
    %60 = arith.addf %56, %59 : vector<32x128xf32>
    %cst_44 = arith.constant 0.000000e+00 : f32
    %61 = vector.broadcast %cst_44 : f32 to vector<32x128xf32>
    %62 = arith.maximumf %60, %61 : vector<32x128xf32>
    %63 = vector.shape_cast %1 : vector<2x16x128xf32> to vector<32x128xf32>
    %64 = arith.truncf %63 : vector<32x128xf32> to vector<32x128xbf16>
    %c0_45 = arith.constant 0 : index
    %c0_46 = arith.constant 0 : index
    %c0_47 = arith.constant 0 : index
    %65 = vector.load %arg6[%c0_45, %c0_46, %c0_47] : memref<1x128x128xbf16, #tpu.memory_space<vmem>>, vector<1x128x128xbf16>
    %66 = vector.shape_cast %65 : vector<1x128x128xbf16> to vector<128x128xbf16>
    %cst_48 = arith.constant dense<0.000000e+00> : vector<32x128xf32>
    %67 = tpu.matmul %64, %66, %cst_48 {dimension_numbers = #tpu.dot_dimension_numbers<[1], [0], [0], [1], [0, 0, 1, 1], [], []>} : vector<32x128xbf16>, vector<128x128xbf16>, vector<32x128xf32> -> vector<32x128xf32>
    %c0_49 = arith.constant 0 : index
    %c0_50 = arith.constant 0 : index
    %c0_51 = arith.constant 0 : index
    %68 = vector.load %arg7[%c0_49, %c0_50, %c0_51] : memref<1x1x128xf32, #tpu.memory_space<vmem>>, vector<1x1x128xf32>
    %69 = vector.shape_cast %68 : vector<1x1x128xf32> to vector<1x128xf32>
    %70 = vector.broadcast %69 : vector<1x128xf32> to vector<32x128xf32>
    %71 = arith.addf %67, %70 : vector<32x128xf32>
    %72 = arith.addf %62, %71 : vector<32x128xf32>
    %cst_52 = arith.constant 0.000000e+00 : f32
    %73 = vector.broadcast %cst_52 : f32 to vector<32x128xf32>
    %74 = arith.maximumf %72, %73 : vector<32x128xf32>
    %75 = vector.shape_cast %74 : vector<32x128xf32> to vector<2x16x128xf32>
    %cst_53 = arith.constant 0.000000e+00 : bf16
    %76 = vector.broadcast %cst_53 : bf16 to vector<2x128xbf16>
    %c0_54 = arith.constant 0 : index
    %c0_55 = arith.constant 0 : index
    %77 = vector.load %arg9[%c0_54, %c0_55] : memref<32x256xbf16, #tpu.memory_space<vmem>>, vector<2x128xbf16>
    tpu.vector_store %arg9[%c0_54, %c0_55], %76 {strides = array<i32>} : memref<32x256xbf16, #tpu.memory_space<vmem>>, vector<2x128xbf16>,
    %78 = vector.extract_strided_slice %75 {offsets = [0, 0, 0], sizes = [1, 14, 128], strides = [1, 1, 1]} : vector<2x16x128xf32> to vector<1x14x128xf32>
    %79 = vector.shape_cast %78 : vector<1x14x128xf32> to vector<14x128xf32>
    %80 = arith.truncf %79 : vector<14x128xf32> to vector<14x128xbf16>
    %c2 = arith.constant 2 : index
    %c0_56 = arith.constant 0 : index
    %81 = vector.load %arg9[%c2, %c0_56] : memref<32x256xbf16, #tpu.memory_space<vmem>>, vector<14x128xbf16>
    tpu.vector_store %arg9[%c2, %c0_56], %80 {strides = array<i32>} : memref<32x256xbf16, #tpu.memory_space<vmem>>, vector<14x128xbf16>,
    %cst_57 = arith.constant 0.000000e+00 : bf16
    %82 = vector.broadcast %cst_57 : bf16 to vector<2x128xbf16>
    %c16_58 = arith.constant 16 : index
    %c0_59 = arith.constant 0 : index
    %83 = vector.load %arg9[%c16_58, %c0_59] : memref<32x256xbf16, #tpu.memory_space<vmem>>, vector<2x128xbf16>
    tpu.vector_store %arg9[%c16_58, %c0_59], %82 {strides = array<i32>} : memref<32x256xbf16, #tpu.memory_space<vmem>>, vector<2x128xbf16>,
    %84 = vector.extract_strided_slice %75 {offsets = [1, 0, 0], sizes = [1, 14, 128], strides = [1, 1, 1]} : vector<2x16x128xf32> to vector<1x14x128xf32>
    %85 = vector.shape_cast %84 : vector<1x14x128xf32> to vector<14x128xf32>
    %86 = arith.truncf %85 : vector<14x128xf32> to vector<14x128xbf16>
    %c18 = arith.constant 18 : index
    %c0_60 = arith.constant 0 : index
    %87 = vector.load %arg9[%c18, %c0_60] : memref<32x256xbf16, #tpu.memory_space<vmem>>, vector<14x128xbf16>
    tpu.vector_store %arg9[%c18, %c0_60], %86 {strides = array<i32>} : memref<32x256xbf16, #tpu.memory_space<vmem>>, vector<14x128xbf16>,
    %88 = vector.extract_strided_slice %75 {offsets = [0, 0, 0], sizes = [1, 16, 128], strides = [1, 1, 1]} : vector<2x16x128xf32> to vector<1x16x128xf32>
    %89 = vector.shape_cast %88 : vector<1x16x128xf32> to vector<16x128xf32>
    %90 = arith.truncf %89 : vector<16x128xf32> to vector<16x128xbf16>
    %c0_61 = arith.constant 0 : index
    %c128_62 = arith.constant 128 : index
    %91 = vector.load %arg9[%c0_61, %c128_62] : memref<32x256xbf16, #tpu.memory_space<vmem>>, vector<16x128xbf16>
    tpu.vector_store %arg9[%c0_61, %c128_62], %90 {strides = array<i32>} : memref<32x256xbf16, #tpu.memory_space<vmem>>, vector<16x128xbf16>,
    %92 = vector.extract_strided_slice %75 {offsets = [1, 0, 0], sizes = [1, 16, 128], strides = [1, 1, 1]} : vector<2x16x128xf32> to vector<1x16x128xf32>
    %93 = vector.shape_cast %92 : vector<1x16x128xf32> to vector<16x128xf32>
    %94 = arith.truncf %93 : vector<16x128xf32> to vector<16x128xbf16>
    %c16_63 = arith.constant 16 : index
    %c128_64 = arith.constant 128 : index
    %95 = vector.load %arg9[%c16_63, %c128_64] : memref<32x256xbf16, #tpu.memory_space<vmem>>, vector<16x128xbf16>
    tpu.vector_store %arg9[%c16_63, %c128_64], %94 {strides = array<i32>} : memref<32x256xbf16, #tpu.memory_space<vmem>>, vector<16x128xbf16>,
    %c0_65 = arith.constant 0 : index
    %c0_66 = arith.constant 0 : index
    %96 = vector.load %arg9[%c0_65, %c0_66] : memref<32x256xbf16, #tpu.memory_space<vmem>>, vector<32x256xbf16>
    %c1_67 = arith.constant 1 : index
    %c0_68 = arith.constant 0 : index
    %c0_69 = arith.constant 0 : index
    %97 = vector.load %arg2[%c1_67, %c0_68, %c0_69] : memref<2x256x128xbf16, #tpu.memory_space<vmem>>, vector<1x256x128xbf16>
    %98 = vector.shape_cast %97 : vector<1x256x128xbf16> to vector<256x128xbf16>
    %cst_70 = arith.constant dense<0.000000e+00> : vector<32x128xf32>
    %99 = tpu.matmul %96, %98, %cst_70 {dimension_numbers = #tpu.dot_dimension_numbers<[1], [0], [0], [1], [0, 0, 1, 1], [], []>} : vector<32x256xbf16>, vector<256x128xbf16>, vector<32x128xf32> -> vector<32x128xf32>
    %c1_71 = arith.constant 1 : index
    %c0_72 = arith.constant 0 : index
    %c0_73 = arith.constant 0 : index
    %100 = vector.load %arg3[%c1_71, %c0_72, %c0_73] : memref<2x1x128xf32, #tpu.memory_space<vmem>>, vector<1x1x128xf32>
    %101 = vector.shape_cast %100 : vector<1x1x128xf32> to vector<1x128xf32>
    %102 = vector.broadcast %101 : vector<1x128xf32> to vector<32x128xf32>
    %103 = arith.addf %99, %102 : vector<32x128xf32>
    %cst_74 = arith.constant 0.000000e+00 : f32
    %104 = vector.broadcast %cst_74 : f32 to vector<32x128xf32>
    %105 = arith.maximumf %103, %104 : vector<32x128xf32>
    %106 = vector.shape_cast %105 : vector<32x128xf32> to vector<2x16x128xf32>
    %cst_75 = arith.constant 0.000000e+00 : bf16
    %107 = vector.broadcast %cst_75 : bf16 to vector<2x128xbf16>
    %c0_76 = arith.constant 0 : index
    %c0_77 = arith.constant 0 : index
    %108 = vector.load %arg9[%c0_76, %c0_77] : memref<32x256xbf16, #tpu.memory_space<vmem>>, vector<2x128xbf16>
    tpu.vector_store %arg9[%c0_76, %c0_77], %107 {strides = array<i32>} : memref<32x256xbf16, #tpu.memory_space<vmem>>, vector<2x128xbf16>,
    %109 = vector.extract_strided_slice %106 {offsets = [0, 0, 0], sizes = [1, 14, 128], strides = [1, 1, 1]} : vector<2x16x128xf32> to vector<1x14x128xf32>
    %110 = vector.shape_cast %109 : vector<1x14x128xf32> to vector<14x128xf32>
    %111 = arith.truncf %110 : vector<14x128xf32> to vector<14x128xbf16>
    %c2_78 = arith.constant 2 : index
    %c0_79 = arith.constant 0 : index
    %112 = vector.load %arg9[%c2_78, %c0_79] : memref<32x256xbf16, #tpu.memory_space<vmem>>, vector<14x128xbf16>
    tpu.vector_store %arg9[%c2_78, %c0_79], %111 {strides = array<i32>} : memref<32x256xbf16, #tpu.memory_space<vmem>>, vector<14x128xbf16>,
    %cst_80 = arith.constant 0.000000e+00 : bf16
    %113 = vector.broadcast %cst_80 : bf16 to vector<2x128xbf16>
    %c16_81 = arith.constant 16 : index
    %c0_82 = arith.constant 0 : index
    %114 = vector.load %arg9[%c16_81, %c0_82] : memref<32x256xbf16, #tpu.memory_space<vmem>>, vector<2x128xbf16>
    tpu.vector_store %arg9[%c16_81, %c0_82], %113 {strides = array<i32>} : memref<32x256xbf16, #tpu.memory_space<vmem>>, vector<2x128xbf16>,
    %115 = vector.extract_strided_slice %106 {offsets = [1, 0, 0], sizes = [1, 14, 128], strides = [1, 1, 1]} : vector<2x16x128xf32> to vector<1x14x128xf32>
    %116 = vector.shape_cast %115 : vector<1x14x128xf32> to vector<14x128xf32>
    %117 = arith.truncf %116 : vector<14x128xf32> to vector<14x128xbf16>
    %c18_83 = arith.constant 18 : index
    %c0_84 = arith.constant 0 : index
    %118 = vector.load %arg9[%c18_83, %c0_84] : memref<32x256xbf16, #tpu.memory_space<vmem>>, vector<14x128xbf16>
    tpu.vector_store %arg9[%c18_83, %c0_84], %117 {strides = array<i32>} : memref<32x256xbf16, #tpu.memory_space<vmem>>, vector<14x128xbf16>,
    %119 = vector.extract_strided_slice %106 {offsets = [0, 0, 0], sizes = [1, 16, 128], strides = [1, 1, 1]} : vector<2x16x128xf32> to vector<1x16x128xf32>
    %120 = vector.shape_cast %119 : vector<1x16x128xf32> to vector<16x128xf32>
    %121 = arith.truncf %120 : vector<16x128xf32> to vector<16x128xbf16>
    %c0_85 = arith.constant 0 : index
    %c128_86 = arith.constant 128 : index
    %122 = vector.load %arg9[%c0_85, %c128_86] : memref<32x256xbf16, #tpu.memory_space<vmem>>, vector<16x128xbf16>
    tpu.vector_store %arg9[%c0_85, %c128_86], %121 {strides = array<i32>} : memref<32x256xbf16, #tpu.memory_space<vmem>>, vector<16x128xbf16>,
    %123 = vector.extract_strided_slice %106 {offsets = [1, 0, 0], sizes = [1, 16, 128], strides = [1, 1, 1]} : vector<2x16x128xf32> to vector<1x16x128xf32>
    %124 = vector.shape_cast %123 : vector<1x16x128xf32> to vector<16x128xf32>
    %125 = arith.truncf %124 : vector<16x128xf32> to vector<16x128xbf16>
    %c16_87 = arith.constant 16 : index
    %c128_88 = arith.constant 128 : index
    %126 = vector.load %arg9[%c16_87, %c128_88] : memref<32x256xbf16, #tpu.memory_space<vmem>>, vector<16x128xbf16>
    tpu.vector_store %arg9[%c16_87, %c128_88], %125 {strides = array<i32>} : memref<32x256xbf16, #tpu.memory_space<vmem>>, vector<16x128xbf16>,
    %c0_89 = arith.constant 0 : index
    %c0_90 = arith.constant 0 : index
    %127 = vector.load %arg9[%c0_89, %c0_90] : memref<32x256xbf16, #tpu.memory_space<vmem>>, vector<32x256xbf16>
    %c1_91 = arith.constant 1 : index
    %c0_92 = arith.constant 0 : index
    %c0_93 = arith.constant 0 : index
    %128 = vector.load %arg4[%c1_91, %c0_92, %c0_93] : memref<2x256x128xbf16, #tpu.memory_space<vmem>>, vector<1x256x128xbf16>
    %129 = vector.shape_cast %128 : vector<1x256x128xbf16> to vector<256x128xbf16>
    %cst_94 = arith.constant dense<0.000000e+00> : vector<32x128xf32>
    %130 = tpu.matmul %127, %129, %cst_94 {dimension_numbers = #tpu.dot_dimension_numbers<[1], [0], [0], [1], [0, 0, 1, 1], [], []>} : vector<32x256xbf16>, vector<256x128xbf16>, vector<32x128xf32> -> vector<32x128xf32>
    %c1_95 = arith.constant 1 : index
    %c0_96 = arith.constant 0 : index
    %c0_97 = arith.constant 0 : index
    %131 = vector.load %arg5[%c1_95, %c0_96, %c0_97] : memref<2x1x128xf32, #tpu.memory_space<vmem>>, vector<1x1x128xf32>
    %132 = vector.shape_cast %131 : vector<1x1x128xf32> to vector<1x128xf32>
    %133 = vector.broadcast %132 : vector<1x128xf32> to vector<32x128xf32>
    %134 = arith.addf %130, %133 : vector<32x128xf32>
    %cst_98 = arith.constant 0.000000e+00 : f32
    %135 = vector.broadcast %cst_98 : f32 to vector<32x128xf32>
    %136 = arith.maximumf %134, %135 : vector<32x128xf32>
    %137 = vector.shape_cast %75 : vector<2x16x128xf32> to vector<32x128xf32>
    %138 = arith.addf %136, %137 : vector<32x128xf32>
    %cst_99 = arith.constant 0.000000e+00 : f32
    %139 = vector.broadcast %cst_99 : f32 to vector<32x128xf32>
    %140 = arith.maximumf %138, %139 : vector<32x128xf32>
    %141 = vector.shape_cast %140 : vector<32x128xf32> to vector<2x16x128xf32>
    %142 = arith.truncf %141 : vector<2x16x128xf32> to vector<2x16x128xbf16>
    %c0_100 = arith.constant 0 : index
    %c0_101 = arith.constant 0 : index
    %c0_102 = arith.constant 0 : index
    %143 = vector.load %arg8[%c0_100, %c0_101, %c0_102] : memref<2x16x128xbf16, #tpu.memory_space<vmem>>, vector<2x16x128xbf16>
    tpu.vector_store %arg8[%c0_100, %c0_101, %c0_102], %142 {strides = array<i32>} : memref<2x16x128xbf16, #tpu.memory_space<vmem>>, vector<2x16x128xbf16>,
    return
  }
  func.func @transform_0(%arg0: i32) -> (i32, i32, i32) {
    %c0_i32 = arith.constant 0 : i32
    %c0_i32_0 = arith.constant 0 : i32
    %c0_i32_1 = arith.constant 0 : i32
    return %arg0, %c0_i32, %c0_i32_0 : i32, i32, i32
  }
  func.func @transform_1(%arg0: i32) -> (i32, i32, i32) {
    %c0_i32 = arith.constant 0 : i32
    %c0_i32_0 = arith.constant 0 : i32
    %c0_i32_1 = arith.constant 0 : i32
    %c0_i32_2 = arith.constant 0 : i32
    return %c0_i32, %c0_i32_0, %c0_i32_1 : i32, i32, i32
  }
  func.func @transform_2(%arg0: i32) -> (i32, i32, i32) {
    %c0_i32 = arith.constant 0 : i32
    %c0_i32_0 = arith.constant 0 : i32
    %c0_i32_1 = arith.constant 0 : i32
    %c0_i32_2 = arith.constant 0 : i32
    return %c0_i32, %c0_i32_0, %c0_i32_1 : i32, i32, i32
  }
  func.func @transform_3(%arg0: i32) -> (i32, i32, i32) {
    %c0_i32 = arith.constant 0 : i32
    %c0_i32_0 = arith.constant 0 : i32
    %c0_i32_1 = arith.constant 0 : i32
    %c0_i32_2 = arith.constant 0 : i32
    return %c0_i32, %c0_i32_0, %c0_i32_1 : i32, i32, i32
  }
  func.func @transform_4(%arg0: i32) -> (i32, i32, i32) {
    %c0_i32 = arith.constant 0 : i32
    %c0_i32_0 = arith.constant 0 : i32
    %c0_i32_1 = arith.constant 0 : i32
    %c0_i32_2 = arith.constant 0 : i32
    return %c0_i32, %c0_i32_0, %c0_i32_1 : i32, i32, i32
  }
  func.func @transform_5(%arg0: i32) -> (i32, i32, i32) {
    %c0_i32 = arith.constant 0 : i32
    %c0_i32_0 = arith.constant 0 : i32
    %c0_i32_1 = arith.constant 0 : i32
    %c0_i32_2 = arith.constant 0 : i32
    return %c0_i32, %c0_i32_0, %c0_i32_1 : i32, i32, i32
  }
  func.func @transform_6(%arg0: i32) -> (i32, i32, i32) {
    %c0_i32 = arith.constant 0 : i32
    %c0_i32_0 = arith.constant 0 : i32
    %c0_i32_1 = arith.constant 0 : i32
    %c0_i32_2 = arith.constant 0 : i32
    return %c0_i32, %c0_i32_0, %c0_i32_1 : i32, i32, i32
  }
  func.func @transform_7(%arg0: i32) -> (i32, i32, i32) {
    %c0_i32 = arith.constant 0 : i32
    %c0_i32_0 = arith.constant 0 : i32
    %c0_i32_1 = arith.constant 0 : i32
    return %arg0, %c0_i32, %c0_i32_0 : i32, i32, i32
  }
}

</mosaic_0001>

<llo_original>
// kernel: tpu_custom_call.1
$region0: #{tpu_custom_call.1}
  #allocation0 [shape = 'u32[]', space=smem, size = 0x4, offset = 0x4, fixed_abs, tag = 'smem constant byte address 0x4 - core index']
  #allocation1 [shape = 'u32[144,128]{1,0:T(1,128)}', space=vmem, size = 0x12000, scoped, tag = 'internal scratch']
  #allocation2 [shape = 'bf16[32,256]{1,0:T(16,128)(2,1)}', space=vmem, size = 0x4000, scoped, tag = 'scratch operand']
  %s0 = inlined_call_operand.hbm [shape: bf16[2,16,128], index: 0, kind: input, shape index: {}]
  %s1 = inlined_call_operand.hbm [shape: bf16[2,256,128], index: 1, kind: input, shape index: {}]
  %s2 = inlined_call_operand.vmem [shape: f32[2,1,128], index: 2, kind: input, shape index: {}]
  %s3 = inlined_call_operand.hbm [shape: bf16[2,256,128], index: 3, kind: input, shape index: {}]
  %s4 = inlined_call_operand.vmem [shape: f32[2,1,128], index: 4, kind: input, shape index: {}]
  %s5 = inlined_call_operand.hbm [shape: bf16[1,128,128], index: 5, kind: input, shape index: {}]
  %s6 = inlined_call_operand.vmem [shape: f32[1,1,128], index: 6, kind: input, shape index: {}]
  %s7 = inlined_call_operand.hbm [shape: bf16[2,16,128], index: 7, kind: output, shape index: {}]
  %s8 = sld [smem:[#allocation0]]
  $region54: #{tpu_custom_call.1} parent=0
    _
  %s10 = ssub.s32 1, %s8
  %s11 = scalar_select 0, %s10, %s8
  $region1: #{tpu_custom_call.1} parent=0
    #allocation3 [shape = 'u8[8192]{0}', space=vmem, size = 0x2000, scoped, tag = 'input window, operand 0, single buffered']
    #allocation4 [shape = 's32[1]{0}', space=sflag, size = 0x4, scoped, tag = 'scoped memory for tpu_custom_call.1']
    #allocation5 [shape = 's32[1]{0}', space=sflag, size = 0x4, scoped, tag = 'scoped memory for tpu_custom_call.1']
    #allocation6 [shape = 'u8[131072]{0}', space=vmem, size = 0x20000, scoped, tag = 'input window, operand 1, single buffered']
    #allocation7 [shape = 's32[1]{0}', space=sflag, size = 0x4, scoped, tag = 'scoped memory for tpu_custom_call.1']
    #allocation8 [shape = 'u8[131072]{0}', space=vmem, size = 0x20000, scoped, tag = 'input window, operand 3, single buffered']
    #allocation9 [shape = 'u8[32768]{0}', space=vmem, size = 0x8000, scoped, tag = 'input window, operand 5, single buffered']
    #allocation10 [shape = 's32[1]{0}', space=sflag, size = 0x4, scoped, tag = 'scoped memory for tpu_custom_call.1']
    #allocation11 [shape = 'u8[8192]{0}', space=vmem, size = 0x2000, scoped, tag = 'output window, operand 0, single buffered']
    %12 = vsyncpa [#allocation4], 0
    %13 = vsyncpa [#allocation7], 0
    %14 = vsyncpa [#allocation10], 0
    %15 = vsyncpa [#allocation5], 0
    // Predicated region
    $region2: #{tpu_custom_call.1} parent=1 // pred_check
      _
    $region3: #{tpu_custom_call.1} parent=1 // pred_check_branch
      %17 = sbr.rel (0) target = $region5
    $region4: #{tpu_custom_call.1} parent=1 // pred_region
      %s19 = ssub.s32 256, 256
      %20 = vsyncadd [#allocation4], %s19
      %s21 = sshll.u32 [#allocation3], 4
      %s22 = int_to_ptr.vmem [resolvable:$true] %s21
      %27 = dma.hbm_to_vmem [thread:$0]  %s0, 256, %s22, [#allocation4], 64, 64, 4
    $region5: #{tpu_custom_call.1} parent=1 // pred_fallthru
      _
    // Predicated region
    $region6: #{tpu_custom_call.1} parent=1 // pred_check
      _
    $region7: #{tpu_custom_call.1} parent=1 // pred_check_branch
      %29 = sbr.rel (0) target = $region9
    $region8: #{tpu_custom_call.1} parent=1 // pred_region
      %s31 = ssub.s32 4096, 4096
      %32 = vsyncadd [#allocation7], %s31
      %s33 = sshll.u32 [#allocation6], 4
      %s34 = int_to_ptr.vmem [resolvable:$true] %s33
      %39 = dma.hbm_to_vmem [thread:$0]  %s1, 4096, %s34, [#allocation7], 64, 64, 4
    $region9: #{tpu_custom_call.1} parent=1 // pred_fallthru
      _
    // Predicated region
    $region10: #{tpu_custom_call.1} parent=1 // pred_check
      _
    $region11: #{tpu_custom_call.1} parent=1 // pred_check_branch
      %41 = sbr.rel (0) target = $region13
    $region12: #{tpu_custom_call.1} parent=1 // pred_region
      _
    $region13: #{tpu_custom_call.1} parent=1 // pred_fallthru
      _
    // Predicated region
    $region14: #{tpu_custom_call.1} parent=1 // pred_check
      _
    $region15: #{tpu_custom_call.1} parent=1 // pred_check_branch
      %43 = sbr.rel (0) target = $region17
    $region16: #{tpu_custom_call.1} parent=1 // pred_region
      %s45 = ssub.s32 4096, 4096
      %46 = vsyncadd [#allocation7], %s45
      %s47 = sshll.u32 [#allocation8], 4
      %s48 = int_to_ptr.vmem [resolvable:$true] %s47
      %53 = dma.hbm_to_vmem [thread:$0]  %s3, 4096, %s48, [#allocation7], 64, 64, 4
    $region17: #{tpu_custom_call.1} parent=1 // pred_fallthru
      _
    // Predicated region
    $region18: #{tpu_custom_call.1} parent=1 // pred_check
      _
    $region19: #{tpu_custom_call.1} parent=1 // pred_check_branch
      %55 = sbr.rel (0) target = $region21
    $region20: #{tpu_custom_call.1} parent=1 // pred_region
      _
    $region21: #{tpu_custom_call.1} parent=1 // pred_fallthru
      _
    // Predicated region
    $region22: #{tpu_custom_call.1} parent=1 // pred_check
      _
    $region23: #{tpu_custom_call.1} parent=1 // pred_check_branch
      %57 = sbr.rel (0) target = $region25
    $region24: #{tpu_custom_call.1} parent=1 // pred_region
      %s59 = ssub.s32 1024, 1024
      %60 = vsyncadd [#allocation10], %s59
      %s61 = sshll.u32 [#allocation9], 4
      %s62 = int_to_ptr.vmem [resolvable:$true] %s61
      %67 = dma.hbm_to_vmem [thread:$0]  %s5, 1024, %s62, [#allocation10], 64, 64, 4
    $region25: #{tpu_custom_call.1} parent=1 // pred_fallthru
      _
    // Predicated region
    $region26: #{tpu_custom_call.1} parent=1 // pred_check
      _
    $region27: #{tpu_custom_call.1} parent=1 // pred_check_branch
      %69 = sbr.rel (0) target = $region29
    $region28: #{tpu_custom_call.1} parent=1 // pred_region
      _
    $region29: #{tpu_custom_call.1} parent=1 // pred_fallthru
      _
    // Predicated region
    $region30: #{tpu_custom_call.1} parent=1 // pred_check
      _
    $region31: #{tpu_custom_call.1} parent=1 // pred_check_branch
      %71 = sbr.rel (0) target = $region33
    $region32: #{tpu_custom_call.1} parent=1 // pred_region
      %72 = dma.done [#allocation4], 256
    $region33: #{tpu_custom_call.1} parent=1 // pred_fallthru
      _
    // Predicated region
    $region34: #{tpu_custom_call.1} parent=1 // pred_check
      _
    $region35: #{tpu_custom_call.1} parent=1 // pred_check_branch
      %74 = sbr.rel (0) target = $region37
    $region36: #{tpu_custom_call.1} parent=1 // pred_region
      %75 = dma.done [#allocation7], 4096
    $region37: #{tpu_custom_call.1} parent=1 // pred_fallthru
      _
    // Predicated region
    $region38: #{tpu_custom_call.1} parent=1 // pred_check
      _
    $region39: #{tpu_custom_call.1} parent=1 // pred_check_branch
      %77 = sbr.rel (0) target = $region41
    $region40: #{tpu_custom_call.1} parent=1 // pred_region
      %78 = dma.done [#allocation7], 4096
    $region41: #{tpu_custom_call.1} parent=1 // pred_fallthru
      _
    // Predicated region
    $region42: #{tpu_custom_call.1} parent=1 // pred_check
      _
    $region43: #{tpu_custom_call.1} parent=1 // pred_check_branch
      %80 = sbr.rel (0) target = $region45
    $region44: #{tpu_custom_call.1} parent=1 // pred_region
      %81 = dma.done [#allocation10], 1024
    $region45: #{tpu_custom_call.1} parent=1 // pred_fallthru
      _
    %v83 = vld [vmem:[#allocation3] sm:$0xf]
    %v84 = vld [vmem:[#allocation3 + $0x4] sm:$0xf]
    %v85 = vld [vmem:[#allocation3 + $0x8] sm:$0xf]
    %v86 = vld [vmem:[#allocation3 + $0xc] sm:$0xf]
    %v87 = vunpack.c.l.bf16 %v83
    %v88 = vunpack.c.l.bf16 %v84
    %v89 = vunpack.c.l.bf16 %v85
    %v90 = vunpack.c.l.bf16 %v86
    %vm91 = vcmask 1040384
    %vm92 = vsmask.f32 256
    %vm93 = vmand %vm91, %vm92
    %v94 = vld [vmem:[#allocation2] sm:$0x1]
    %v95 = vsel %vm93, 0, %v94
    %96 = vst [vmem:[#allocation2] sm:$0x1] %v95
    %v97 = vpack.c.bf16 %v88, %v87
    %v99 = vshrl.u32 %v97, 16
    %v101 = vrot.slane %v99, 7
    %v102 = vshll.u32 %v97, 16
    %v104 = vor.u32 %v101, %v102
    %vm106 = vcmask 1047552
    %vm107 = vsmask.f32 7938
    %vm108 = vmand %vm106, %vm107
    %v109 = vld [vmem:[#allocation2] sm:$0xff]
    %v110 = vsel %vm108, %v104, %v109
    %111 = vst [vmem:[#allocation2] sm:$0xff] %v110
    %v112 = vld [vmem:[#allocation2 + $0x10] sm:$0x1]
    %v113 = vsel %vm93, 0, %v112
    %114 = vst [vmem:[#allocation2 + $0x10] sm:$0x1] %v113
    %v115 = vpack.c.bf16 %v90, %v89
    %v117 = vshrl.u32 %v115, 16
    %v119 = vrot.slane %v117, 7
    %v120 = vshll.u32 %v115, 16
    %v122 = vor.u32 %v119, %v120
    %v124 = vld [vmem:[#allocation2 + $0x10] sm:$0xff]
    %v125 = vsel %vm108, %v122, %v124
    %126 = vst [vmem:[#allocation2 + $0x10] sm:$0xff] %v125
    %127 = vst [vmem:[#allocation2 + $0x8] sm:$0xff] %v97
    %128 = vst [vmem:[#allocation2 + $0x18] sm:$0xff] %v115
    %v129 = vld [vmem:[#allocation2] sm:$0xff]
    %v130 = vld [vmem:[#allocation2 + $0x8] sm:$0xff]
    %v131 = vld [vmem:[#allocation2 + $0x10] sm:$0xff]
    %v132 = vld [vmem:[#allocation2 + $0x18] sm:$0xff]
    %v133 = vld [vmem:[#allocation6] sm:$0xf]
    %v134 = vld [vmem:[#allocation6 + $0x4] sm:$0xf]
    %v135 = vld [vmem:[#allocation6 + $0x8] sm:$0xf]
    %v136 = vld [vmem:[#allocation6 + $0xc] sm:$0xf]
    %v137 = vld [vmem:[#allocation6 + $0x10] sm:$0xf]
    %v138 = vld [vmem:[#allocation6 + $0x14] sm:$0xf]
    %v139 = vld [vmem:[#allocation6 + $0x18] sm:$0xf]
    %v140 = vld [vmem:[#allocation6 + $0x1c] sm:$0xf]
    %v141 = vld [vmem:[#allocation6 + $0x20] sm:$0xf]
    %v142 = vld [vmem:[#allocation6 + $0x24] sm:$0xf]
    %v143 = vld [vmem:[#allocation6 + $0x28] sm:$0xf]
    %v144 = vld [vmem:[#allocation6 + $0x2c] sm:$0xf]
    %v145 = vld [vmem:[#allocation6 + $0x30] sm:$0xf]
    %v146 = vld [vmem:[#allocation6 + $0x34] sm:$0xf]
    %v147 = vld [vmem:[#allocation6 + $0x38] sm:$0xf]
    %v148 = vld [vmem:[#allocation6 + $0x3c] sm:$0xf]
    %v149 = vld [vmem:[#allocation6 + $0x40] sm:$0xf]
    %v150 = vld [vmem:[#allocation6 + $0x44] sm:$0xf]
    %v151 = vld [vmem:[#allocation6 + $0x48] sm:$0xf]
    %v152 = vld [vmem:[#allocation6 + $0x4c] sm:$0xf]
    %v153 = vld [vmem:[#allocation6 + $0x50] sm:$0xf]
    %v154 = vld [vmem:[#allocation6 + $0x54] sm:$0xf]
    %v155 = vld [vmem:[#allocation6 + $0x58] sm:$0xf]
    %v156 = vld [vmem:[#allocation6 + $0x5c] sm:$0xf]
    %v157 = vld [vmem:[#allocation6 + $0x60] sm:$0xf]
    %v158 = vld [vmem:[#allocation6 + $0x64] sm:$0xf]
    %v159 = vld [vmem:[#allocation6 + $0x68] sm:$0xf]
    %v160 = vld [vmem:[#allocation6 + $0x6c] sm:$0xf]
    %v161 = vld [vmem:[#allocation6 + $0x70] sm:$0xf]
    %v162 = vld [vmem:[#allocation6 + $0x74] sm:$0xf]
    %v163 = vld [vmem:[#allocation6 + $0x78] sm:$0xf]
    %v164 = vld [vmem:[#allocation6 + $0x7c] sm:$0xf]
    %v165 = vld [vmem:[%s2] sm:$0x1]
    %v167 = vlaneseq
    %v168 = vshrl.u32 %v167, 7
    %v169 = vsub.s32 0, %v168
    %v170 = vrot.slane %v165, %v169
    %v204 = vunpack.c.l.b16 %v133
    %v205 = vunpack.c.l.b16 %v134
    %v206 = vunpack.c.l.b16 %v135
    %v207 = vunpack.c.l.b16 %v136
    %v208 = vunpack.c.l.b16 %v137
    %v209 = vunpack.c.l.b16 %v138
    %v210 = vunpack.c.l.b16 %v139
    %v211 = vunpack.c.l.b16 %v140
    %v212 = vunpack.c.l.b16 %v141
    %v213 = vunpack.c.l.b16 %v142
    %v214 = vunpack.c.l.b16 %v143
    %v215 = vunpack.c.l.b16 %v144
    %v216 = vunpack.c.l.b16 %v145
    %v217 = vunpack.c.l.b16 %v146
    %v218 = vunpack.c.l.b16 %v147
    %v219 = vunpack.c.l.b16 %v148
    %v220 = vunpack.c.l.b16 %v149
    %v221 = vunpack.c.l.b16 %v150
    %v222 = vunpack.c.l.b16 %v151
    %v223 = vunpack.c.l.b16 %v152
    %v224 = vunpack.c.l.b16 %v153
    %v225 = vunpack.c.l.b16 %v154
    %v226 = vunpack.c.l.b16 %v155
    %v227 = vunpack.c.l.b16 %v156
    %v228 = vunpack.c.l.b16 %v157
    %v229 = vunpack.c.l.b16 %v158
    %v230 = vunpack.c.l.b16 %v159
    %v231 = vunpack.c.l.b16 %v160
    %v232 = vunpack.c.l.b16 %v161
    %v233 = vunpack.c.l.b16 %v162
    %v234 = vunpack.c.l.b16 %v163
    %v235 = vunpack.c.l.b16 %v164
    %v236 = vpack.c.b16 %v205, %v204
    %v237 = vpack.c.b16 %v207, %v206
    %v238 = vpack.c.b16 %v209, %v208
    %v239 = vpack.c.b16 %v211, %v210
    %v240 = vpack.c.b16 %v213, %v212
    %v241 = vpack.c.b16 %v215, %v214
    %v242 = vpack.c.b16 %v217, %v216
    %v243 = vpack.c.b16 %v219, %v218
    %v244 = vpack.c.b16 %v221, %v220
    %v245 = vpack.c.b16 %v223, %v222
    %v246 = vpack.c.b16 %v225, %v224
    %v247 = vpack.c.b16 %v227, %v226
    %v248 = vpack.c.b16 %v229, %v228
    %v249 = vpack.c.b16 %v231, %v230
    %v250 = vpack.c.b16 %v233, %v232
    %v251 = vpack.c.b16 %v235, %v234
    %268 = vmatprep.subr.bf16.mxu0 0
    %269 = vmatpush1.bf16.msra.mxu0 %v236
    %270 = vmatprep.subr.bf16.mxu0 0
    %271 = vmatpush1.bf16.msra.mxu0 %v237
    %272 = vmatprep.subr.bf16.mxu0 0
    %273 = vmatpush1.bf16.msra.mxu0 %v238
    %274 = vmatprep.subr.bf16.mxu0 0
    %275 = vmatpush1.bf16.msra.mxu0 %v239
    %276 = vmatprep.subr.bf16.mxu0 0
    %277 = vmatpush1.bf16.msra.mxu0 %v240
    %278 = vmatprep.subr.bf16.mxu0 0
    %279 = vmatpush1.bf16.msra.mxu0 %v241
    %280 = vmatprep.subr.bf16.mxu0 0
    %281 = vmatpush1.bf16.msra.mxu0 %v242
    %282 = vmatprep.subr.bf16.mxu0 0
    %283 = vmatpush1.bf16.msra.mxu0 %v243
    %284 = vmatprep.subr.bf16.mxu0 0
    %285 = vmatpush1.bf16.msra.mxu0 %v244
    %286 = vmatprep.subr.bf16.mxu0 0
    %287 = vmatpush1.bf16.msra.mxu0 %v245
    %288 = vmatprep.subr.bf16.mxu0 0
    %289 = vmatpush1.bf16.msra.mxu0 %v246
    %290 = vmatprep.subr.bf16.mxu0 0
    %291 = vmatpush1.bf16.msra.mxu0 %v247
    %292 = vmatprep.subr.bf16.mxu0 0
    %293 = vmatpush1.bf16.msra.mxu0 %v248
    %294 = vmatprep.subr.bf16.mxu0 0
    %295 = vmatpush1.bf16.msra.mxu0 %v249
    %296 = vmatprep.subr.bf16.mxu0 0
    %297 = vmatpush1.bf16.msra.mxu0 %v250
    %298 = vmatprep.subr.bf16.mxu0 0
    %299 = vmatpush1.bf16.msra.mxu0 %v251
    %300 = vmatprep.mubr.bf16.mxu0 %v130
    %301 = vmatmul.mubr.bf16.gmra.mrb[0].mxu0 %v129
    %v302 = vpop.f32.mrb[0].mxu0
    %v303 = vadd.f32 %v170, %v302
    %v304 = vpop.f32.mrb[0].mxu0
    %v305 = vpop.f32.mrb[0].mxu0
    %v306 = vadd.f32 %v170, %v305
    %v307 = vpop.f32.mrb[0].mxu0
    %308 = vmatprep.mubr.bf16.mxu0 %v132
    %309 = vmatmul.mubr.bf16.gmra.mrb[0].mxu0 %v131
    %v310 = vpop.f32.mrb[0].mxu0
    %v311 = vadd.f32 %v170, %v310
    %v312 = vpop.f32.mrb[0].mxu0
    %v313 = vpop.f32.mrb[0].mxu0
    %v314 = vadd.f32 %v170, %v313
    %v315 = vpop.f32.mrb[0].mxu0
    %316 = vdwg.mxu0
    %v317 = vmax.f32 %v303, 0.0
    %v318 = vmax.f32 %v306, 0.0
    %v319 = vmax.f32 %v311, 0.0
    %v320 = vmax.f32 %v314, 0.0
    %v321 = vld [vmem:[#allocation2] sm:$0x1]
    %v322 = vsel %vm93, 0, %v321
    %323 = vst [vmem:[#allocation2] sm:$0x1] %v322
    %v324 = vpack.c.bf16 %v318, %v317
    %v326 = vshrl.u32 %v324, 16
    %v328 = vrot.slane %v326, 7
    %v329 = vshll.u32 %v324, 16
    %v331 = vor.u32 %v328, %v329
    %v333 = vld [vmem:[#allocation2] sm:$0xff]
    %v334 = vsel %vm108, %v331, %v333
    %335 = vst [vmem:[#allocation2] sm:$0xff] %v334
    %v336 = vld [vmem:[#allocation2 + $0x10] sm:$0x1]
    %v337 = vsel %vm93, 0, %v336
    %338 = vst [vmem:[#allocation2 + $0x10] sm:$0x1] %v337
    %v339 = vpack.c.bf16 %v320, %v319
    %v341 = vshrl.u32 %v339, 16
    %v343 = vrot.slane %v341, 7
    %v344 = vshll.u32 %v339, 16
    %v346 = vor.u32 %v343, %v344
    %v348 = vld [vmem:[#allocation2 + $0x10] sm:$0xff]
    %v349 = vsel %vm108, %v346, %v348
    %350 = vst [vmem:[#allocation2 + $0x10] sm:$0xff] %v349
    %351 = vst [vmem:[#allocation2 + $0x8] sm:$0xff] %v324
    %352 = vst [vmem:[#allocation2 + $0x18] sm:$0xff] %v339
    %v353 = vld [vmem:[#allocation2] sm:$0xff]
    %v354 = vld [vmem:[#allocation2 + $0x8] sm:$0xff]
    %v355 = vld [vmem:[#allocation2 + $0x10] sm:$0xff]
    %v356 = vld [vmem:[#allocation2 + $0x18] sm:$0xff]
    %v357 = vld [vmem:[#allocation8] sm:$0xf]
    %v358 = vld [vmem:[#allocation8 + $0x4] sm:$0xf]
    %v359 = vld [vmem:[#allocation8 + $0x8] sm:$0xf]
    %v360 = vld [vmem:[#allocation8 + $0xc] sm:$0xf]
    %v361 = vld [vmem:[#allocation8 + $0x10] sm:$0xf]
    %v362 = vld [vmem:[#allocation8 + $0x14] sm:$0xf]
    %v363 = vld [vmem:[#allocation8 + $0x18] sm:$0xf]
    %v364 = vld [vmem:[#allocation8 + $0x1c] sm:$0xf]
    %v365 = vld [vmem:[#allocation8 + $0x20] sm:$0xf]
    %v366 = vld [vmem:[#allocation8 + $0x24] sm:$0xf]
    %v367 = vld [vmem:[#allocation8 + $0x28] sm:$0xf]
    %v368 = vld [vmem:[#allocation8 + $0x2c] sm:$0xf]
    %v369 = vld [vmem:[#allocation8 + $0x30] sm:$0xf]
    %v370 = vld [vmem:[#allocation8 + $0x34] sm:$0xf]
    %v371 = vld [vmem:[#allocation8 + $0x38] sm:$0xf]
    %v372 = vld [vmem:[#allocation8 + $0x3c] sm:$0xf]
    %v373 = vld [vmem:[#allocation8 + $0x40] sm:$0xf]
    %v374 = vld [vmem:[#allocation8 + $0x44] sm:$0xf]
    %v375 = vld [vmem:[#allocation8 + $0x48] sm:$0xf]
    %v376 = vld [vmem:[#allocation8 + $0x4c] sm:$0xf]
    %v377 = vld [vmem:[#allocation8 + $0x50] sm:$0xf]
    %v378 = vld [vmem:[#allocation8 + $0x54] sm:$0xf]
    %v379 = vld [vmem:[#allocation8 + $0x58] sm:$0xf]
    %v380 = vld [vmem:[#allocation8 + $0x5c] sm:$0xf]
    %v381 = vld [vmem:[#allocation8 + $0x60] sm:$0xf]
    %v382 = vld [vmem:[#allocation8 + $0x64] sm:$0xf]
    %v383 = vld [vmem:[#allocation8 + $0x68] sm:$0xf]
    %v384 = vld [vmem:[#allocation8 + $0x6c] sm:$0xf]
    %v385 = vld [vmem:[#allocation8 + $0x70] sm:$0xf]
    %v386 = vld [vmem:[#allocation8 + $0x74] sm:$0xf]
    %v387 = vld [vmem:[#allocation8 + $0x78] sm:$0xf]
    %v388 = vld [vmem:[#allocation8 + $0x7c] sm:$0xf]
    %v389 = vld [vmem:[%s4] sm:$0x1]
    %v391 = vlaneseq
    %v392 = vshrl.u32 %v391, 7
    %v393 = vsub.s32 0, %v392
    %v394 = vrot.slane %v389, %v393
    %v428 = vunpack.c.l.b16 %v357
    %v429 = vunpack.c.l.b16 %v358
    %v430 = vunpack.c.l.b16 %v359
    %v431 = vunpack.c.l.b16 %v360
    %v432 = vunpack.c.l.b16 %v361
    %v433 = vunpack.c.l.b16 %v362
    %v434 = vunpack.c.l.b16 %v363
    %v435 = vunpack.c.l.b16 %v364
    %v436 = vunpack.c.l.b16 %v365
    %v437 = vunpack.c.l.b16 %v366
    %v438 = vunpack.c.l.b16 %v367
    %v439 = vunpack.c.l.b16 %v368
    %v440 = vunpack.c.l.b16 %v369
    %v441 = vunpack.c.l.b16 %v370
    %v442 = vunpack.c.l.b16 %v371
    %v443 = vunpack.c.l.b16 %v372
    %v444 = vunpack.c.l.b16 %v373
    %v445 = vunpack.c.l.b16 %v374
    %v446 = vunpack.c.l.b16 %v375
    %v447 = vunpack.c.l.b16 %v376
    %v448 = vunpack.c.l.b16 %v377
    %v449 = vunpack.c.l.b16 %v378
    %v450 = vunpack.c.l.b16 %v379
    %v451 = vunpack.c.l.b16 %v380
    %v452 = vunpack.c.l.b16 %v381
    %v453 = vunpack.c.l.b16 %v382
    %v454 = vunpack.c.l.b16 %v383
    %v455 = vunpack.c.l.b16 %v384
    %v456 = vunpack.c.l.b16 %v385
    %v457 = vunpack.c.l.b16 %v386
    %v458 = vunpack.c.l.b16 %v387
    %v459 = vunpack.c.l.b16 %v388
    %v460 = vpack.c.b16 %v429, %v428
    %v461 = vpack.c.b16 %v431, %v430
    %v462 = vpack.c.b16 %v433, %v432
    %v463 = vpack.c.b16 %v435, %v434
    %v464 = vpack.c.b16 %v437, %v436
    %v465 = vpack.c.b16 %v439, %v438
    %v466 = vpack.c.b16 %v441, %v440
    %v467 = vpack.c.b16 %v443, %v442
    %v468 = vpack.c.b16 %v445, %v444
    %v469 = vpack.c.b16 %v447, %v446
    %v470 = vpack.c.b16 %v449, %v448
    %v471 = vpack.c.b16 %v451, %v450
    %v472 = vpack.c.b16 %v453, %v452
    %v473 = vpack.c.b16 %v455, %v454
    %v474 = vpack.c.b16 %v457, %v456
    %v475 = vpack.c.b16 %v459, %v458
    %492 = vmatprep.subr.bf16.mxu0 0
    %493 = vmatpush1.bf16.msra.mxu0 %v460
    %494 = vmatprep.subr.bf16.mxu0 0
    %495 = vmatpush1.bf16.msra.mxu0 %v461
    %496 = vmatprep.subr.bf16.mxu0 0
    %497 = vmatpush1.bf16.msra.mxu0 %v462
    %498 = vmatprep.subr.bf16.mxu0 0
    %499 = vmatpush1.bf16.msra.mxu0 %v463
    %500 = vmatprep.subr.bf16.mxu0 0
    %501 = vmatpush1.bf16.msra.mxu0 %v464
    %502 = vmatprep.subr.bf16.mxu0 0
    %503 = vmatpush1.bf16.msra.mxu0 %v465
    %504 = vmatprep.subr.bf16.mxu0 0
    %505 = vmatpush1.bf16.msra.mxu0 %v466
    %506 = vmatprep.subr.bf16.mxu0 0
    %507 = vmatpush1.bf16.msra.mxu0 %v467
    %508 = vmatprep.subr.bf16.mxu0 0
    %509 = vmatpush1.bf16.msra.mxu0 %v468
    %510 = vmatprep.subr.bf16.mxu0 0
    %511 = vmatpush1.bf16.msra.mxu0 %v469
    %512 = vmatprep.subr.bf16.mxu0 0
    %513 = vmatpush1.bf16.msra.mxu0 %v470
    %514 = vmatprep.subr.bf16.mxu0 0
    %515 = vmatpush1.bf16.msra.mxu0 %v471
    %516 = vmatprep.subr.bf16.mxu0 0
    %517 = vmatpush1.bf16.msra.mxu0 %v472
    %518 = vmatprep.subr.bf16.mxu0 0
    %519 = vmatpush1.bf16.msra.mxu0 %v473
    %520 = vmatprep.subr.bf16.mxu0 0
    %521 = vmatpush1.bf16.msra.mxu0 %v474
    %522 = vmatprep.subr.bf16.mxu0 0
    %523 = vmatpush1.bf16.msra.mxu0 %v475
    %524 = vmatprep.mubr.bf16.mxu0 %v354
    %525 = vmatmul.mubr.bf16.gmra.mrb[0].mxu0 %v353
    %v526 = vpop.f32.mrb[0].mxu0
    %v527 = vadd.f32 %v394, %v526
    %v528 = vpop.f32.mrb[0].mxu0
    %v529 = vpop.f32.mrb[0].mxu0
    %v530 = vadd.f32 %v394, %v529
    %v531 = vpop.f32.mrb[0].mxu0
    %532 = vmatprep.mubr.bf16.mxu0 %v356
    %533 = vmatmul.mubr.bf16.gmra.mrb[0].mxu0 %v355
    %v534 = vpop.f32.mrb[0].mxu0
    %v535 = vadd.f32 %v394, %v534
    %v536 = vpop.f32.mrb[0].mxu0
    %v537 = vpop.f32.mrb[0].mxu0
    %v538 = vadd.f32 %v394, %v537
    %v539 = vpop.f32.mrb[0].mxu0
    %540 = vdwg.mxu0
    %v541 = vmax.f32 %v527, 0.0
    %v542 = vmax.f32 %v530, 0.0
    %v543 = vmax.f32 %v535, 0.0
    %v544 = vmax.f32 %v538, 0.0
    %v545 = vld [vmem:[#allocation9] sm:$0xf]
    %v546 = vld [vmem:[#allocation9 + $0x4] sm:$0xf]
    %v547 = vld [vmem:[#allocation9 + $0x8] sm:$0xf]
    %v548 = vld [vmem:[#allocation9 + $0xc] sm:$0xf]
    %v549 = vld [vmem:[#allocation9 + $0x10] sm:$0xf]
    %v550 = vld [vmem:[#allocation9 + $0x14] sm:$0xf]
    %v551 = vld [vmem:[#allocation9 + $0x18] sm:$0xf]
    %v552 = vld [vmem:[#allocation9 + $0x1c] sm:$0xf]
    %v553 = vld [vmem:[#allocation9 + $0x20] sm:$0xf]
    %v554 = vld [vmem:[#allocation9 + $0x24] sm:$0xf]
    %v555 = vld [vmem:[#allocation9 + $0x28] sm:$0xf]
    %v556 = vld [vmem:[#allocation9 + $0x2c] sm:$0xf]
    %v557 = vld [vmem:[#allocation9 + $0x30] sm:$0xf]
    %v558 = vld [vmem:[#allocation9 + $0x34] sm:$0xf]
    %v559 = vld [vmem:[#allocation9 + $0x38] sm:$0xf]
    %v560 = vld [vmem:[#allocation9 + $0x3c] sm:$0xf]
    %v561 = vld [vmem:[%s6] sm:$0x1]
    %v563 = vlaneseq
    %v564 = vshrl.u32 %v563, 7
    %v565 = vsub.s32 0, %v564
    %v566 = vrot.slane %v561, %v565
    %v584 = vunpack.c.l.b16 %v545
    %v585 = vunpack.c.l.b16 %v546
    %v586 = vunpack.c.l.b16 %v547
    %v587 = vunpack.c.l.b16 %v548
    %v588 = vunpack.c.l.b16 %v549
    %v589 = vunpack.c.l.b16 %v550
    %v590 = vunpack.c.l.b16 %v551
    %v591 = vunpack.c.l.b16 %v552
    %v592 = vunpack.c.l.b16 %v553
    %v593 = vunpack.c.l.b16 %v554
    %v594 = vunpack.c.l.b16 %v555
    %v595 = vunpack.c.l.b16 %v556
    %v596 = vunpack.c.l.b16 %v557
    %v597 = vunpack.c.l.b16 %v558
    %v598 = vunpack.c.l.b16 %v559
    %v599 = vunpack.c.l.b16 %v560
    %v600 = vpack.c.b16 %v585, %v584
    %v601 = vpack.c.b16 %v587, %v586
    %v602 = vpack.c.b16 %v589, %v588
    %v603 = vpack.c.b16 %v591, %v590
    %v604 = vpack.c.b16 %v593, %v592
    %v605 = vpack.c.b16 %v595, %v594
    %v606 = vpack.c.b16 %v597, %v596
    %v607 = vpack.c.b16 %v599, %v598
    %616 = vmatprep.subr.bf16.mxu0 0
    %617 = vmatpush1.bf16.msra.mxu0 %v600
    %618 = vmatprep.subr.bf16.mxu0 0
    %619 = vmatpush1.bf16.msra.mxu0 %v601
    %620 = vmatprep.subr.bf16.mxu0 0
    %621 = vmatpush1.bf16.msra.mxu0 %v602
    %622 = vmatprep.subr.bf16.mxu0 0
    %623 = vmatpush1.bf16.msra.mxu0 %v603
    %624 = vmatprep.subr.bf16.mxu0 0
    %625 = vmatpush1.bf16.msra.mxu0 %v604
    %626 = vmatprep.subr.bf16.mxu0 0
    %627 = vmatpush1.bf16.msra.mxu0 %v605
    %628 = vmatprep.subr.bf16.mxu0 0
    %629 = vmatpush1.bf16.msra.mxu0 %v606
    %630 = vmatprep.subr.bf16.mxu0 0
    %631 = vmatpush1.bf16.msra.mxu0 %v607
    %632 = vmatprep.subr.bf16.mxu0 0
    %633 = vmatpush1.bf16.msra.mxu0 0
    %634 = vmatprep.subr.bf16.mxu0 0
    %635 = vmatpush1.bf16.msra.mxu0 0
    %636 = vmatprep.subr.bf16.mxu0 0
    %637 = vmatpush1.bf16.msra.mxu0 0
    %638 = vmatprep.subr.bf16.mxu0 0
    %639 = vmatpush1.bf16.msra.mxu0 0
    %640 = vmatprep.subr.bf16.mxu0 0
    %641 = vmatpush1.bf16.msra.mxu0 0
    %642 = vmatprep.subr.bf16.mxu0 0
    %643 = vmatpush1.bf16.msra.mxu0 0
    %644 = vmatprep.subr.bf16.mxu0 0
    %645 = vmatpush1.bf16.msra.mxu0 0
    %646 = vmatprep.subr.bf16.mxu0 0
    %647 = vmatpush1.bf16.msra.mxu0 0
    %648 = vmatprep.mubr.bf16.mxu0 0
    %649 = vmatmul.mubr.bf16.gmra.mrb[0].mxu0 %v97
    %v650 = vpop.f32.mrb[0].mxu0
    %v651 = vadd.f32 %v566, %v650
    %v652 = vpop.f32.mrb[0].mxu0
    %v653 = vpop.f32.mrb[0].mxu0
    %v654 = vadd.f32 %v566, %v653
    %v655 = vpop.f32.mrb[0].mxu0
    %656 = vmatprep.mubr.bf16.mxu0 0
    %657 = vmatmul.mubr.bf16.gmra.mrb[0].mxu0 %v115
    %v658 = vpop.f32.mrb[0].mxu0
    %v659 = vadd.f32 %v566, %v658
    %v660 = vpop.f32.mrb[0].mxu0
    %v661 = vpop.f32.mrb[0].mxu0
    %v662 = vadd.f32 %v566, %v661
    %v663 = vpop.f32.mrb[0].mxu0
    %664 = vdwg.mxu0
    %v665 = vadd.f32 %v541, %v651
    %v666 = vadd.f32 %v542, %v654
    %v667 = vadd.f32 %v543, %v659
    %v668 = vadd.f32 %v544, %v662
    %v669 = vmax.f32 %v665, 0.0
    %v670 = vmax.f32 %v666, 0.0
    %v671 = vmax.f32 %v667, 0.0
    %v672 = vmax.f32 %v668, 0.0
    %673 = vst [vmem:[#allocation2] sm:$0x1] 0
    %v674 = vpack.c.bf16 %v670, %v669
    %v676 = vrot.slane %v674, 7
    %678 = vst [vmem:[#allocation2] sm:$0xfe] %v676
    %679 = vst [vmem:[#allocation2 + $0x10] sm:$0x1] 0
    %v680 = vpack.c.bf16 %v672, %v671
    %v682 = vrot.slane %v680, 7
    %684 = vst [vmem:[#allocation2 + $0x10] sm:$0xfe] %v682
    %685 = vst [vmem:[#allocation2 + $0x8] sm:$0xff] %v674
    %686 = vst [vmem:[#allocation2 + $0x18] sm:$0xff] %v680
    %v687 = vld [vmem:[#allocation2] sm:$0xff]
    %v688 = vld [vmem:[#allocation2 + $0x8] sm:$0xff]
    %v689 = vld [vmem:[#allocation2 + $0x10] sm:$0xff]
    %v690 = vld [vmem:[#allocation2 + $0x18] sm:$0xff]
    %s691 = scalar_lea.vmem [#allocation6], 128
    %v692 = vld [vmem:[%s691] sm:$0xf]
    %v693 = vld [vmem:[%s691 + $0x4] sm:$0xf]
    %v694 = vld [vmem:[%s691 + $0x8] sm:$0xf]
    %v695 = vld [vmem:[%s691 + $0xc] sm:$0xf]
    %v696 = vld [vmem:[%s691 + $0x10] sm:$0xf]
    %v697 = vld [vmem:[%s691 + $0x14] sm:$0xf]
    %v698 = vld [vmem:[%s691 + $0x18] sm:$0xf]
    %v699 = vld [vmem:[%s691 + $0x1c] sm:$0xf]
    %v700 = vld [vmem:[%s691 + $0x20] sm:$0xf]
    %v701 = vld [vmem:[%s691 + $0x24] sm:$0xf]
    %v702 = vld [vmem:[%s691 + $0x28] sm:$0xf]
    %v703 = vld [vmem:[%s691 + $0x2c] sm:$0xf]
    %v704 = vld [vmem:[%s691 + $0x30] sm:$0xf]
    %v705 = vld [vmem:[%s691 + $0x34] sm:$0xf]
    %v706 = vld [vmem:[%s691 + $0x38] sm:$0xf]
    %v707 = vld [vmem:[%s691 + $0x3c] sm:$0xf]
    %v708 = vld [vmem:[%s691 + $0x40] sm:$0xf]
    %v709 = vld [vmem:[%s691 + $0x44] sm:$0xf]
    %v710 = vld [vmem:[%s691 + $0x48] sm:$0xf]
    %v711 = vld [vmem:[%s691 + $0x4c] sm:$0xf]
    %v712 = vld [vmem:[%s691 + $0x50] sm:$0xf]
    %v713 = vld [vmem:[%s691 + $0x54] sm:$0xf]
    %v714 = vld [vmem:[%s691 + $0x58] sm:$0xf]
    %v715 = vld [vmem:[%s691 + $0x5c] sm:$0xf]
    %v716 = vld [vmem:[%s691 + $0x60] sm:$0xf]
    %v717 = vld [vmem:[%s691 + $0x64] sm:$0xf]
    %v718 = vld [vmem:[%s691 + $0x68] sm:$0xf]
    %v719 = vld [vmem:[%s691 + $0x6c] sm:$0xf]
    %v720 = vld [vmem:[%s691 + $0x70] sm:$0xf]
    %v721 = vld [vmem:[%s691 + $0x74] sm:$0xf]
    %v722 = vld [vmem:[%s691 + $0x78] sm:$0xf]
    %v723 = vld [vmem:[%s691 + $0x7c] sm:$0xf]
    %s724 = scalar_lea.vmem %s2, 1
    %v725 = vld [vmem:[%s724] sm:$0x1]
    %v727 = vlaneseq
    %v728 = vshrl.u32 %v727, 7
    %v729 = vsub.s32 0, %v728
    %v730 = vrot.slane %v725, %v729
    %v764 = vunpack.c.l.b16 %v692
    %v765 = vunpack.c.l.b16 %v693
    %v766 = vunpack.c.l.b16 %v694
    %v767 = vunpack.c.l.b16 %v695
    %v768 = vunpack.c.l.b16 %v696
    %v769 = vunpack.c.l.b16 %v697
    %v770 = vunpack.c.l.b16 %v698
    %v771 = vunpack.c.l.b16 %v699
    %v772 = vunpack.c.l.b16 %v700
    %v773 = vunpack.c.l.b16 %v701
    %v774 = vunpack.c.l.b16 %v702
    %v775 = vunpack.c.l.b16 %v703
    %v776 = vunpack.c.l.b16 %v704
    %v777 = vunpack.c.l.b16 %v705
    %v778 = vunpack.c.l.b16 %v706
    %v779 = vunpack.c.l.b16 %v707
    %v780 = vunpack.c.l.b16 %v708
    %v781 = vunpack.c.l.b16 %v709
    %v782 = vunpack.c.l.b16 %v710
    %v783 = vunpack.c.l.b16 %v711
    %v784 = vunpack.c.l.b16 %v712
    %v785 = vunpack.c.l.b16 %v713
    %v786 = vunpack.c.l.b16 %v714
    %v787 = vunpack.c.l.b16 %v715
    %v788 = vunpack.c.l.b16 %v716
    %v789 = vunpack.c.l.b16 %v717
    %v790 = vunpack.c.l.b16 %v718
    %v791 = vunpack.c.l.b16 %v719
    %v792 = vunpack.c.l.b16 %v720
    %v793 = vunpack.c.l.b16 %v721
    %v794 = vunpack.c.l.b16 %v722
    %v795 = vunpack.c.l.b16 %v723
    %v796 = vpack.c.b16 %v765, %v764
    %v797 = vpack.c.b16 %v767, %v766
    %v798 = vpack.c.b16 %v769, %v768
    %v799 = vpack.c.b16 %v771, %v770
    %v800 = vpack.c.b16 %v773, %v772
    %v801 = vpack.c.b16 %v775, %v774
    %v802 = vpack.c.b16 %v777, %v776
    %v803 = vpack.c.b16 %v779, %v778
    %v804 = vpack.c.b16 %v781, %v780
    %v805 = vpack.c.b16 %v783, %v782
    %v806 = vpack.c.b16 %v785, %v784
    %v807 = vpack.c.b16 %v787, %v786
    %v808 = vpack.c.b16 %v789, %v788
    %v809 = vpack.c.b16 %v791, %v790
    %v810 = vpack.c.b16 %v793, %v792
    %v811 = vpack.c.b16 %v795, %v794
    %828 = vmatprep.subr.bf16.mxu0 0
    %829 = vmatpush1.bf16.msra.mxu0 %v796
    %830 = vmatprep.subr.bf16.mxu0 0
    %831 = vmatpush1.bf16.msra.mxu0 %v797
    %832 = vmatprep.subr.bf16.mxu0 0
    %833 = vmatpush1.bf16.msra.mxu0 %v798
    %834 = vmatprep.subr.bf16.mxu0 0
    %835 = vmatpush1.bf16.msra.mxu0 %v799
    %836 = vmatprep.subr.bf16.mxu0 0
    %837 = vmatpush1.bf16.msra.mxu0 %v800
    %838 = vmatprep.subr.bf16.mxu0 0
    %839 = vmatpush1.bf16.msra.mxu0 %v801
    %840 = vmatprep.subr.bf16.mxu0 0
    %841 = vmatpush1.bf16.msra.mxu0 %v802
    %842 = vmatprep.subr.bf16.mxu0 0
    %843 = vmatpush1.bf16.msra.mxu0 %v803
    %844 = vmatprep.subr.bf16.mxu0 0
    %845 = vmatpush1.bf16.msra.mxu0 %v804
    %846 = vmatprep.subr.bf16.mxu0 0
    %847 = vmatpush1.bf16.msra.mxu0 %v805
    %848 = vmatprep.subr.bf16.mxu0 0
    %849 = vmatpush1.bf16.msra.mxu0 %v806
    %850 = vmatprep.subr.bf16.mxu0 0
    %851 = vmatpush1.bf16.msra.mxu0 %v807
    %852 = vmatprep.subr.bf16.mxu0 0
    %853 = vmatpush1.bf16.msra.mxu0 %v808
    %854 = vmatprep.subr.bf16.mxu0 0
    %855 = vmatpush1.bf16.msra.mxu0 %v809
    %856 = vmatprep.subr.bf16.mxu0 0
    %857 = vmatpush1.bf16.msra.mxu0 %v810
    %858 = vmatprep.subr.bf16.mxu0 0
    %859 = vmatpush1.bf16.msra.mxu0 %v811
    %860 = vmatprep.mubr.bf16.mxu0 %v688
    %861 = vmatmul.mubr.bf16.gmra.mrb[0].mxu0 %v687
    %v862 = vpop.f32.mrb[0].mxu0
    %v863 = vadd.f32 %v730, %v862
    %v864 = vpop.f32.mrb[0].mxu0
    %v865 = vpop.f32.mrb[0].mxu0
    %v866 = vadd.f32 %v730, %v865
    %v867 = vpop.f32.mrb[0].mxu0
    %868 = vmatprep.mubr.bf16.mxu0 %v690
    %869 = vmatmul.mubr.bf16.gmra.mrb[0].mxu0 %v689
    %v870 = vpop.f32.mrb[0].mxu0
    %v871 = vadd.f32 %v730, %v870
    %v872 = vpop.f32.mrb[0].mxu0
    %v873 = vpop.f32.mrb[0].mxu0
    %v874 = vadd.f32 %v730, %v873
    %v875 = vpop.f32.mrb[0].mxu0
    %876 = vdwg.mxu0
    %v877 = vmax.f32 %v863, 0.0
    %v878 = vmax.f32 %v866, 0.0
    %v879 = vmax.f32 %v871, 0.0
    %v880 = vmax.f32 %v874, 0.0
    %881 = vst [vmem:[#allocation2] sm:$0x1] 0
    %v882 = vpack.c.bf16 %v878, %v877
    %v884 = vrot.slane %v882, 7
    %886 = vst [vmem:[#allocation2] sm:$0xfe] %v884
    %887 = vst [vmem:[#allocation2 + $0x10] sm:$0x1] 0
    %v888 = vpack.c.bf16 %v880, %v879
    %v890 = vrot.slane %v888, 7
    %892 = vst [vmem:[#allocation2 + $0x10] sm:$0xfe] %v890
    %893 = vst [vmem:[#allocation2 + $0x8] sm:$0xff] %v882
    %894 = vst [vmem:[#allocation2 + $0x18] sm:$0xff] %v888
    %v895 = vld [vmem:[#allocation2] sm:$0xff]
    %v896 = vld [vmem:[#allocation2 + $0x8] sm:$0xff]
    %v897 = vld [vmem:[#allocation2 + $0x10] sm:$0xff]
    %v898 = vld [vmem:[#allocation2 + $0x18] sm:$0xff]
    %s899 = scalar_lea.vmem [#allocation8], 128
    %v900 = vld [vmem:[%s899] sm:$0xf]
    %v901 = vld [vmem:[%s899 + $0x4] sm:$0xf]
    %v902 = vld [vmem:[%s899 + $0x8] sm:$0xf]
    %v903 = vld [vmem:[%s899 + $0xc] sm:$0xf]
    %v904 = vld [vmem:[%s899 + $0x10] sm:$0xf]
    %v905 = vld [vmem:[%s899 + $0x14] sm:$0xf]
    %v906 = vld [vmem:[%s899 + $0x18] sm:$0xf]
    %v907 = vld [vmem:[%s899 + $0x1c] sm:$0xf]
    %v908 = vld [vmem:[%s899 + $0x20] sm:$0xf]
    %v909 = vld [vmem:[%s899 + $0x24] sm:$0xf]
    %v910 = vld [vmem:[%s899 + $0x28] sm:$0xf]
    %v911 = vld [vmem:[%s899 + $0x2c] sm:$0xf]
    %v912 = vld [vmem:[%s899 + $0x30] sm:$0xf]
    %v913 = vld [vmem:[%s899 + $0x34] sm:$0xf]
    %v914 = vld [vmem:[%s899 + $0x38] sm:$0xf]
    %v915 = vld [vmem:[%s899 + $0x3c] sm:$0xf]
    %v916 = vld [vmem:[%s899 + $0x40] sm:$0xf]
    %v917 = vld [vmem:[%s899 + $0x44] sm:$0xf]
    %v918 = vld [vmem:[%s899 + $0x48] sm:$0xf]
    %v919 = vld [vmem:[%s899 + $0x4c] sm:$0xf]
    %v920 = vld [vmem:[%s899 + $0x50] sm:$0xf]
    %v921 = vld [vmem:[%s899 + $0x54] sm:$0xf]
    %v922 = vld [vmem:[%s899 + $0x58] sm:$0xf]
    %v923 = vld [vmem:[%s899 + $0x5c] sm:$0xf]
    %v924 = vld [vmem:[%s899 + $0x60] sm:$0xf]
    %v925 = vld [vmem:[%s899 + $0x64] sm:$0xf]
    %v926 = vld [vmem:[%s899 + $0x68] sm:$0xf]
    %v927 = vld [vmem:[%s899 + $0x6c] sm:$0xf]
    %v928 = vld [vmem:[%s899 + $0x70] sm:$0xf]
    %v929 = vld [vmem:[%s899 + $0x74] sm:$0xf]
    %v930 = vld [vmem:[%s899 + $0x78] sm:$0xf]
    %v931 = vld [vmem:[%s899 + $0x7c] sm:$0xf]
    %s932 = scalar_lea.vmem %s4, 1
    %v933 = vld [vmem:[%s932] sm:$0x1]
    %v935 = vlaneseq
    %v936 = vshrl.u32 %v935, 7
    %v937 = vsub.s32 0, %v936
    %v938 = vrot.slane %v933, %v937
    %v972 = vunpack.c.l.b16 %v900
    %v973 = vunpack.c.l.b16 %v901
    %v974 = vunpack.c.l.b16 %v902
    %v975 = vunpack.c.l.b16 %v903
    %v976 = vunpack.c.l.b16 %v904
    %v977 = vunpack.c.l.b16 %v905
    %v978 = vunpack.c.l.b16 %v906
    %v979 = vunpack.c.l.b16 %v907
    %v980 = vunpack.c.l.b16 %v908
    %v981 = vunpack.c.l.b16 %v909
    %v982 = vunpack.c.l.b16 %v910
    %v983 = vunpack.c.l.b16 %v911
    %v984 = vunpack.c.l.b16 %v912
    %v985 = vunpack.c.l.b16 %v913
    %v986 = vunpack.c.l.b16 %v914
    %v987 = vunpack.c.l.b16 %v915
    %v988 = vunpack.c.l.b16 %v916
    %v989 = vunpack.c.l.b16 %v917
    %v990 = vunpack.c.l.b16 %v918
    %v991 = vunpack.c.l.b16 %v919
    %v992 = vunpack.c.l.b16 %v920
    %v993 = vunpack.c.l.b16 %v921
    %v994 = vunpack.c.l.b16 %v922
    %v995 = vunpack.c.l.b16 %v923
    %v996 = vunpack.c.l.b16 %v924
    %v997 = vunpack.c.l.b16 %v925
    %v998 = vunpack.c.l.b16 %v926
    %v999 = vunpack.c.l.b16 %v927
    %v1000 = vunpack.c.l.b16 %v928
    %v1001 = vunpack.c.l.b16 %v929
    %v1002 = vunpack.c.l.b16 %v930
    %v1003 = vunpack.c.l.b16 %v931
    %v1004 = vpack.c.b16 %v973, %v972
    %v1005 = vpack.c.b16 %v975, %v974
    %v1006 = vpack.c.b16 %v977, %v976
    %v1007 = vpack.c.b16 %v979, %v978
    %v1008 = vpack.c.b16 %v981, %v980
    %v1009 = vpack.c.b16 %v983, %v982
    %v1010 = vpack.c.b16 %v985, %v984
    %v1011 = vpack.c.b16 %v987, %v986
    %v1012 = vpack.c.b16 %v989, %v988
    %v1013 = vpack.c.b16 %v991, %v990
    %v1014 = vpack.c.b16 %v993, %v992
    %v1015 = vpack.c.b16 %v995, %v994
    %v1016 = vpack.c.b16 %v997, %v996
    %v1017 = vpack.c.b16 %v999, %v998
    %v1018 = vpack.c.b16 %v1001, %v1000
    %v1019 = vpack.c.b16 %v1003, %v1002
    %1036 = vmatprep.subr.bf16.mxu0 0
    %1037 = vmatpush1.bf16.msra.mxu0 %v1004
    %1038 = vmatprep.subr.bf16.mxu0 0
    %1039 = vmatpush1.bf16.msra.mxu0 %v1005
    %1040 = vmatprep.subr.bf16.mxu0 0
    %1041 = vmatpush1.bf16.msra.mxu0 %v1006
    %1042 = vmatprep.subr.bf16.mxu0 0
    %1043 = vmatpush1.bf16.msra.mxu0 %v1007
    %1044 = vmatprep.subr.bf16.mxu0 0
    %1045 = vmatpush1.bf16.msra.mxu0 %v1008
    %1046 = vmatprep.subr.bf16.mxu0 0
    %1047 = vmatpush1.bf16.msra.mxu0 %v1009
    %1048 = vmatprep.subr.bf16.mxu0 0
    %1049 = vmatpush1.bf16.msra.mxu0 %v1010
    %1050 = vmatprep.subr.bf16.mxu0 0
    %1051 = vmatpush1.bf16.msra.mxu0 %v1011
    %1052 = vmatprep.subr.bf16.mxu0 0
    %1053 = vmatpush1.bf16.msra.mxu0 %v1012
    %1054 = vmatprep.subr.bf16.mxu0 0
    %1055 = vmatpush1.bf16.msra.mxu0 %v1013
    %1056 = vmatprep.subr.bf16.mxu0 0
    %1057 = vmatpush1.bf16.msra.mxu0 %v1014
    %1058 = vmatprep.subr.bf16.mxu0 0
    %1059 = vmatpush1.bf16.msra.mxu0 %v1015
    %1060 = vmatprep.subr.bf16.mxu0 0
    %1061 = vmatpush1.bf16.msra.mxu0 %v1016
    %1062 = vmatprep.subr.bf16.mxu0 0
    %1063 = vmatpush1.bf16.msra.mxu0 %v1017
    %1064 = vmatprep.subr.bf16.mxu0 0
    %1065 = vmatpush1.bf16.msra.mxu0 %v1018
    %1066 = vmatprep.subr.bf16.mxu0 0
    %1067 = vmatpush1.bf16.msra.mxu0 %v1019
    %1068 = vmatprep.mubr.bf16.mxu0 %v896
    %1069 = vmatmul.mubr.bf16.gmra.mrb[0].mxu0 %v895
    %v1070 = vpop.f32.mrb[0].mxu0
    %v1071 = vadd.f32 %v938, %v1070
    %v1072 = vpop.f32.mrb[0].mxu0
    %v1073 = vpop.f32.mrb[0].mxu0
    %v1074 = vadd.f32 %v938, %v1073
    %v1075 = vpop.f32.mrb[0].mxu0
    %1076 = vmatprep.mubr.bf16.mxu0 %v898
    %1077 = vmatmul.mubr.bf16.gmra.mrb[0].mxu0 %v897
    %v1078 = vpop.f32.mrb[0].mxu0
    %v1079 = vadd.f32 %v938, %v1078
    %v1080 = vpop.f32.mrb[0].mxu0
    %v1081 = vpop.f32.mrb[0].mxu0
    %v1082 = vadd.f32 %v938, %v1081
    %v1083 = vpop.f32.mrb[0].mxu0
    %1084 = vdwg.mxu0
    %v1085 = vmax.f32 %v1071, 0.0
    %v1086 = vmax.f32 %v1074, 0.0
    %v1087 = vmax.f32 %v1079, 0.0
    %v1088 = vmax.f32 %v1082, 0.0
    %v1089 = vadd.f32 %v1085, %v669
    %v1090 = vadd.f32 %v1086, %v670
    %v1091 = vadd.f32 %v1087, %v671
    %v1092 = vadd.f32 %v1088, %v672
    %v1093 = vmax.f32 %v1089, 0.0
    %v1094 = vmax.f32 %v1090, 0.0
    %v1095 = vmax.f32 %v1091, 0.0
    %v1096 = vmax.f32 %v1092, 0.0
    %v1097 = vpack.c.bf16 %v1094, %v1093
    %v1098 = vpack.c.bf16 %v1096, %v1095
    %v1101 = vunpack.c.l.b16 %v1097
    %v1102 = vunpack.c.h.b16 %v1097
    %v1103 = vunpack.c.l.b16 %v1098
    %v1104 = vunpack.c.h.b16 %v1098
    %v1105 = vpack.c.b16 %v1101, %v1101
    %v1106 = vpack.c.b16 %v1102, %v1102
    %v1107 = vpack.c.b16 %v1103, %v1103
    %v1108 = vpack.c.b16 %v1104, %v1104
    %1113 = vst [vmem:[#allocation11] sm:$0xf] %v1105
    %1114 = vst [vmem:[#allocation11 + $0x4] sm:$0xf] %v1106
    %1115 = vst [vmem:[#allocation11 + $0x8] sm:$0xf] %v1107
    %1116 = vst [vmem:[#allocation11 + $0xc] sm:$0xf] %v1108
    // Predicated region
    $region46: #{tpu_custom_call.1} parent=1 // pred_check
      _
    $region47: #{tpu_custom_call.1} parent=1 // pred_check_branch
      %1118 = sbr.rel (0) target = $region49
    $region48: #{tpu_custom_call.1} parent=1 // pred_region
      %s1120 = ssub.s32 256, 256
      %1121 = vsyncadd [#allocation5], %s1120
      %s1122 = sshll.u32 [#allocation11], 4
      %s1123 = int_to_ptr.vmem [resolvable:$true] %s1122
      %1128 = dma.vmem_to_hbm [thread:$0]  %s1123, 256, %s7, [#allocation5], 64, 64, 4
    $region49: #{tpu_custom_call.1} parent=1 // pred_fallthru
      _
    // Predicated region
    $region50: #{tpu_custom_call.1} parent=1 // pred_check
      _
    $region51: #{tpu_custom_call.1} parent=1 // pred_check_branch
      %1130 = sbr.rel (0) target = $region53
    $region52: #{tpu_custom_call.1} parent=1 // pred_region
      %1131 = dma.done [#allocation5], 256
    $region53: #{tpu_custom_call.1} parent=1 // pred_fallthru
      _
    %1132 = vsyncpa [#allocation4], 1
    %1133 = vsyncpa [#allocation7], 1
    %1134 = vsyncpa [#allocation10], 1
    %1135 = vsyncpa [#allocation5], 1

</llo_original>
